<compile_context>
chip_gen: v5e
topology: v5e:2x2
jax: 0.10.0
libtpu: 0.0.40
codegen_flags: <defaults>
</compile_context>

<pallas_src>
import jax
import jax.numpy as jnp
from jax.experimental import pallas as pl
from jax.experimental.pallas import tpu as pltpu


def _round_up(x, m):
    return ((x + m - 1) // m) * m


def _pick_targets():
    """Target tile sizes (tk over Din, tf over F) and scoped-VMEM budget per gen."""
    try:
        kind = jax.devices()[0].device_kind.lower()
    except Exception:
        kind = ""
    if "v5" in kind:
        # 128 MiB VMEM, lowest HBM BW: biggest Wb tiles (footprint ~30 MiB << 64).
        return 4096, 1024, 64 * 1024 * 1024
    if "v6" in kind:
        return 2048, 1024, 64 * 1024 * 1024
    # v7x (64 MiB physical VMEM) / unknown: same tile targets, 32 MiB scoped budget
    # (double-buffered footprint ~16 MiB fits comfortably).
    return 2048, 1024, 32 * 1024 * 1024


def _pick_tile(dim, target):
    """Largest tile (multiple of 128, <= target) minimizing padding of `dim`.

    Returns (tile, padded_dim) with tile | padded_dim, so streamed bytes of the
    tiled operand are never inflated beyond the minimal 128-rounding.
    """
    dim_u = _round_up(dim, 128) // 128          # in 128-lane units
    max_u = max(1, min(target // 128, dim_u))
    best_u, best_pad = 1, dim_u
    for d in range(1, max_u + 1):
        padded = -(-dim_u // d) * d
        if padded < best_pad or (padded == best_pad and d > best_u):
            best_u, best_pad = d, padded
    return best_u * 128, best_pad * 128


def _make_kernel(with_loss, b_real, b_pad, tb):
    """Fused backbone-projection + classifier kernel.

    Grid = (b, j, k) = (batch tile, F tile, Din tile); Din is the reduction axis.
    """

    def kernel(x_ref, wb_ref, bb_ref, wc_ref, bc_ref, *rest):
        if with_loss:
            logits_ref, loss_ref, feat_acc, logit_acc, sq_acc = rest
        else:
            logits_ref, feat_acc, logit_acc = rest

        b = pl.program_id(0)
        j = pl.program_id(1)
        k = pl.program_id(2)
        nj = pl.num_programs(1)
        nk = pl.num_programs(2)

        # Zero the feature accumulator at the start of each Din reduction.
        @pl.when(k == 0)
        def _():
            feat_acc[...] = jnp.zeros_like(feat_acc)

        # Zero the resident per-batch-tile accumulators at the start of the tile.
        @pl.when(jnp.logical_and(j == 0, k == 0))
        def _():
            logit_acc[...] = jnp.zeros_like(logit_acc)
            if with_loss:
                sq_acc[...] = jnp.zeros_like(sq_acc)

        # Backbone projection partial product on the MXU (bf16 in, f32 accumulate).
        feat_acc[...] += jnp.dot(
            x_ref[...], wb_ref[...], preferred_element_type=jnp.float32
        )

        last_k = k == nk - 1

        # Finalize this F tile once the Din reduction is complete.
        @pl.when(last_k)
        def _():
            feat = feat_acc[...] + bb_ref[...]  # backbone bias added exactly once
            # Classifier matmul in bf16 (MXU-native); f32 accumulate.
            logit_acc[...] += jnp.dot(
                feat.astype(jnp.bfloat16), wc_ref[...],
                preferred_element_type=jnp.float32,
            )
            if with_loss:
                # Per-row partial sums only; scalar reduce deferred to the end.
                sq_acc[...] += jnp.sum(feat * feat, axis=1, keepdims=True)

        # Very last F tile of this batch block: write lane-dense logits + loss.
        @pl.when(jnp.logical_and(last_k, j == nj - 1))
        def _():
            logits_ref[...] = logit_acc[...] + bc_ref[...]
            if with_loss:
                rows = sq_acc[...]
                if b_pad > b_real:
                    # Mask padded batch rows (their feat == bb, not real data);
                    # done once per batch tile, off the per-step critical path.
                    ridx = b * tb + jax.lax.broadcasted_iota(
                        jnp.int32, rows.shape, 0
                    )
                    rows = jnp.where(ridx < b_real, rows, 0.0)
                total = jnp.sum(rows, axis=0, keepdims=True)      # (1, 1)
                loss_ref[...] = jnp.zeros((8, 128), jnp.float32) + total

    return kernel


def init_params(key, din, feat_dim, num_class):
    """Logical (unpadded) parameters, nn.Linear-style uniform init."""
    k1, k2, k3, k4 = jax.random.split(key, 4)
    lim_b = 1.0 / jnp.sqrt(din)
    lim_c = 1.0 / jnp.sqrt(feat_dim)
    wb = jax.random.uniform(k1, (din, feat_dim), jnp.float32, -lim_b, lim_b)
    bb = jax.random.uniform(k2, (1, feat_dim), jnp.float32, -lim_b, lim_b)
    wc = jax.random.uniform(k3, (feat_dim, num_class), jnp.float32, -lim_c, lim_c)
    bc = jax.random.uniform(k4, (1, num_class), jnp.float32, -lim_c, lim_c)
    return {"wb": wb, "bb": bb, "wc": wc, "bc": bc}


def pack_params(params, din, feat_dim, num_class):
    """One-time padding/casting of parameters (outside the per-call path)."""
    tk_t, tf_t, vmem_limit = _pick_targets()
    tk, din_p = _pick_tile(din, tk_t)
    tf, f_p = _pick_tile(feat_dim, tf_t)
    c_p = _round_up(num_class, 128)  # lane-dense classifier output

    wb = (
        jnp.zeros((din_p, f_p), jnp.bfloat16)
        .at[:din, :feat_dim]
        .set(params["wb"].astype(jnp.bfloat16))
    )
    bb = jnp.zeros((1, f_p), jnp.float32).at[:, :feat_dim].set(params["bb"])
    wc = (
        jnp.zeros((f_p, c_p), jnp.bfloat16)
        .at[:feat_dim, :num_class]
        .set(params["wc"].astype(jnp.bfloat16))
    )
    bc = jnp.zeros((1, c_p), jnp.float32).at[:, :num_class].set(params["bc"])

    cfg = dict(
        din=din, feat_dim=feat_dim, num_class=num_class,
        din_p=din_p, f_p=f_p, c_p=c_p, tk=tk, tf=tf, vmem_limit=vmem_limit,
    )
    return {"wb": wb, "bb": bb, "wc": wc, "bc": bc, "cfg": cfg}


def l2p_forward(x, packed, train=True):
    """Forward pass of the L2P Model.

    x: [B, C, H, W] float32 (NCHW, like PyTorch).
    Returns (logits, loss) if train else logits.
    """
    cfg = packed["cfg"]
    din, feat_dim, num_class = cfg["din"], cfg["feat_dim"], cfg["num_class"]
    din_p, f_p, c_p = cfg["din_p"], cfg["f_p"], cfg["c_p"]
    tk, tf = cfg["tk"], cfg["tf"]

    B = x.shape[0]
    # Batch tile: multiple of 16 (bf16 sublane packing), up to 512 so Wb is
    # re-streamed as few times as possible (it is the dominant HBM traffic).
    tb = min(_round_up(B, 16), 512)
    b_p = _round_up(B, tb)
    nb = b_p // tb

    # Flatten NCHW -> [B, Din] (row-major, like torch.flatten), cast to bf16, and
    # zero-pad in a single fused pad (no extra HBM pass).
    x_flat = x.reshape(B, -1).astype(jnp.bfloat16)
    pad_b, pad_d = b_p - B, din_p - din
    x_pad = jnp.pad(x_flat, ((0, pad_b), (0, pad_d))) if (pad_b or pad_d) else x_flat

    grid = (nb, f_p // tf, din_p // tk)

    in_specs = [
        pl.BlockSpec((tb, tk), lambda b, j, k: (b, k)),    # x (bf16)
        pl.BlockSpec((tk, tf), lambda b, j, k: (k, j)),    # Wb (bf16, streamed)
        pl.BlockSpec((1, tf), lambda b, j, k: (0, j)),     # bb (f32)
        pl.BlockSpec((tf, c_p), lambda b, j, k: (j, 0)),   # Wc (bf16)
        pl.BlockSpec((1, c_p), lambda b, j, k: (0, 0)),    # bc (f32)
    ]
    logits_spec = pl.BlockSpec((tb, c_p), lambda b, j, k: (b, 0))
    base_scratch = [
        pltpu.VMEM((tb, tf), jnp.float32),   # feature accumulator
        pltpu.VMEM((tb, c_p), jnp.float32),  # logits accumulator
    ]
    args = (x_pad, packed["wb"], packed["bb"], packed["wc"], packed["bc"])
    cparams = pltpu.CompilerParams(
        # Batch axis is parallel in BOTH paths (per-tile loss partials remove the
        # resident scalar accumulator) -> megacore / 2-TC sharding on v7x.
        dimension_semantics=("parallel", "arbitrary", "arbitrary"),
        vmem_limit_bytes=cfg["vmem_limit"],
    )

    if train:
        kernel = _make_kernel(True, B, b_p, tb)
        logits_p, loss_parts = pl.pallas_call(
            kernel,
            out_shape=(
                jax.ShapeDtypeStruct((b_p, c_p), jnp.float32),
                jax.ShapeDtypeStruct((nb * 8, 128), jnp.float32),  # lane-dense partials
            ),
            grid=grid,
            in_specs=in_specs,
            out_specs=(
                logits_spec,
                pl.BlockSpec((8, 128), lambda b, j, k: (b, 0)),
            ),
            scratch_shapes=base_scratch + [pltpu.VMEM((tb, 1), jnp.float32)],
            compiler_params=cparams,
        )(*args)
        # Final reduction + mean normalization of sum(feat^2) done in JAX.
        loss = jnp.sum(loss_parts.reshape(nb, 8, 128)[:, 0, 0]) / (B * feat_dim)
        return logits_p[:B, :num_class], loss

    # Eval path: no loss output / reduction at all.
    kernel = _make_kernel(False, B, b_p, tb)
    logits_p = pl.pallas_call(
        kernel,
        out_shape=jax.ShapeDtypeStruct((b_p, c_p), jnp.float32),
        grid=grid,
        in_specs=in_specs,
        out_specs=logits_spec,
        scratch_shapes=base_scratch,
        compiler_params=cparams,
    )(*args)
    return logits_p[:B, :num_class]


if __name__ == "__main__":
    # Small shapes consistent with the forward: image [B, C, H, W] -> feat
    # [B, feat_dim] -> logits [B, num_class].
    B, C, H, W = 2, 4, 16, 16
    feat_dim, num_class = 256, 10
    din = C * H * W  # 1024

    key = jax.random.PRNGKey(0)
    kx, kp = jax.random.split(key)
    x = jax.random.normal(kx, (B, C, H, W), jnp.float32)
    params = init_params(kp, din, feat_dim, num_class)
    packed = pack_params(params, din, feat_dim, num_class)

    # train=True path: (logits, loss)
    logits, loss = l2p_forward(x, packed, train=True)
    logits = jax.block_until_ready(logits)
    loss = jax.block_until_ready(loss)

    # eval path: logits only
    logits_eval = jax.block_until_ready(l2p_forward(x, packed, train=False))

    # sanity: cross-check against plain-JAX reference (same bf16 casts as kernel)
    x_flat = x.reshape(B, -1).astype(jnp.bfloat16)
    wb_bf = params["wb"].astype(jnp.bfloat16)
    wc_bf = params["wc"].astype(jnp.bfloat16)
    feat_ref = (
        jnp.dot(x_flat, wb_bf, preferred_element_type=jnp.float32) + params["bb"]
    )
    logits_ref = (
        jnp.dot(feat_ref.astype(jnp.bfloat16), wc_bf,
                preferred_element_type=jnp.float32)
        + params["bc"]
    )
    loss_ref = jnp.mean(feat_ref * feat_ref)

    assert logits.shape == (B, num_class)
    assert logits_eval.shape == (B, num_class)
    assert jnp.allclose(logits, logits_ref, atol=2e-2, rtol=2e-2)
    assert jnp.allclose(logits_eval, logits_ref, atol=2e-2, rtol=2e-2)
    assert jnp.allclose(loss, loss_ref, atol=2e-2, rtol=2e-2)

    print("KERNEL_OK")
</pallas_src>

<mosaic_0001>
module attributes {stable_mosaic.version = 11 : i64} {
  func.func @kernel(%arg0: i32, %arg1: i32, %arg2: i32, %arg3: memref<16x1024xbf16, #tpu.memory_space<vmem>>, %arg4: memref<1024x256xbf16, #tpu.memory_space<vmem>>, %arg5: memref<1x256xf32, #tpu.memory_space<vmem>>, %arg6: memref<256x128xbf16, #tpu.memory_space<vmem>>, %arg7: memref<1x128xf32, #tpu.memory_space<vmem>>, %arg8: memref<16x128xf32, #tpu.memory_space<vmem>>, %arg9: memref<8x128xf32, #tpu.memory_space<vmem>>, %arg10: memref<16x256xf32, #tpu.memory_space<vmem>>, %arg11: memref<16x128xf32, #tpu.memory_space<vmem>>, %arg12: memref<16x1xf32, #tpu.memory_space<vmem>>) attributes {dimension_semantics = [#tpu.dimension_semantics<parallel>, #tpu.dimension_semantics<arbitrary>, #tpu.dimension_semantics<arbitrary>], iteration_bounds = array<i64: 1, 1, 1>, scalar_prefetch = 0 : i64, scratch_operands = 3 : i64, tpu.core_type = #tpu.core_type<tc>, window_params = [{transform_indices = @transform_0, window_bounds = array<i64: 16, 1024>}, {transform_indices = @transform_1, window_bounds = array<i64: 1024, 256>}, {transform_indices = @transform_2, window_bounds = array<i64: 1, 256>}, {transform_indices = @transform_3, window_bounds = array<i64: 256, 128>}, {pipeline_mode = #tpu.pipeline_mode<synchronous>, transform_indices = @transform_4, window_bounds = array<i64: 1, 128>}, {transform_indices = @transform_5, window_bounds = array<i64: 16, 128>}, {transform_indices = @transform_6, window_bounds = array<i64: 8, 128>}]} {
    %c0_i32 = arith.constant 0 : i32
    %0 = arith.cmpi eq, %arg2, %c0_i32 : i32
    %1 = arith.extui %0 : i1 to i32
    %c0_i32_0 = arith.constant 0 : i32
    %2 = arith.cmpi ne, %1, %c0_i32_0 : i32
    scf.if %2 {
      %cst_15 = arith.constant 0.000000e+00 : f32
      %21 = vector.broadcast %cst_15 : f32 to vector<16x256xf32>
      %c0_16 = arith.constant 0 : index
      %c0_17 = arith.constant 0 : index
      %22 = vector.load %arg10[%c0_16, %c0_17] : memref<16x256xf32, #tpu.memory_space<vmem>>, vector<16x256xf32>
      tpu.vector_store %arg10[%c0_16, %c0_17], %21 {strides = array<i32>} : memref<16x256xf32, #tpu.memory_space<vmem>>, vector<16x256xf32>,
    } else {
    }
    %c0_i32_1 = arith.constant 0 : i32
    %3 = arith.cmpi eq, %arg1, %c0_i32_1 : i32
    %c0_i32_2 = arith.constant 0 : i32
    %4 = arith.cmpi eq, %arg2, %c0_i32_2 : i32
    %5 = arith.andi %3, %4 : i1
    %6 = arith.extui %5 : i1 to i32
    %c0_i32_3 = arith.constant 0 : i32
    %7 = arith.cmpi ne, %6, %c0_i32_3 : i32
    scf.if %7 {
      %cst_15 = arith.constant 0.000000e+00 : f32
      %21 = vector.broadcast %cst_15 : f32 to vector<16x128xf32>
      %c0_16 = arith.constant 0 : index
      %c0_17 = arith.constant 0 : index
      %22 = vector.load %arg11[%c0_16, %c0_17] : memref<16x128xf32, #tpu.memory_space<vmem>>, vector<16x128xf32>
      tpu.vector_store %arg11[%c0_16, %c0_17], %21 {strides = array<i32>} : memref<16x128xf32, #tpu.memory_space<vmem>>, vector<16x128xf32>,
      %cst_18 = arith.constant 0.000000e+00 : f32
      %23 = vector.broadcast %cst_18 : f32 to vector<16x1xf32>
      %c0_19 = arith.constant 0 : index
      %c0_20 = arith.constant 0 : index
      %24 = vector.load %arg12[%c0_19, %c0_20] : memref<16x1xf32, #tpu.memory_space<vmem>>, vector<16x1xf32>
      tpu.vector_store %arg12[%c0_19, %c0_20], %23 {strides = array<i32>} : memref<16x1xf32, #tpu.memory_space<vmem>>, vector<16x1xf32>,
    } else {
    }
    %c0 = arith.constant 0 : index
    %c0_4 = arith.constant 0 : index
    %8 = vector.load %arg10[%c0, %c0_4] : memref<16x256xf32, #tpu.memory_space<vmem>>, vector<16x256xf32>
    %c0_5 = arith.constant 0 : index
    %c0_6 = arith.constant 0 : index
    %9 = vector.load %arg3[%c0_5, %c0_6] : memref<16x1024xbf16, #tpu.memory_space<vmem>>, vector<16x1024xbf16>
    %c0_7 = arith.constant 0 : index
    %c0_8 = arith.constant 0 : index
    %10 = vector.load %arg4[%c0_7, %c0_8] : memref<1024x256xbf16, #tpu.memory_space<vmem>>, vector<1024x256xbf16>
    %cst = arith.constant dense<0.000000e+00> : vector<16x256xf32>
    %11 = tpu.matmul %9, %10, %cst {dimension_numbers = #tpu.dot_dimension_numbers<[1], [0], [0], [1], [0, 0, 1, 1], [], []>} : vector<16x1024xbf16>, vector<1024x256xbf16>, vector<16x256xf32> -> vector<16x256xf32>
    %12 = arith.addf %8, %11 : vector<16x256xf32>
    %c0_9 = arith.constant 0 : index
    %c0_10 = arith.constant 0 : index
    %13 = vector.load %arg10[%c0_9, %c0_10] : memref<16x256xf32, #tpu.memory_space<vmem>>, vector<16x256xf32>
    tpu.vector_store %arg10[%c0_9, %c0_10], %12 {strides = array<i32>} : memref<16x256xf32, #tpu.memory_space<vmem>>, vector<16x256xf32>,
    %c0_i32_11 = arith.constant 0 : i32
    %14 = arith.cmpi eq, %arg2, %c0_i32_11 : i32
    %15 = arith.extui %14 : i1 to i32
    %c0_i32_12 = arith.constant 0 : i32
    %16 = arith.cmpi ne, %15, %c0_i32_12 : i32
    scf.if %16 {
      %c0_15 = arith.constant 0 : index
      %c0_16 = arith.constant 0 : index
      %21 = vector.load %arg10[%c0_15, %c0_16] : memref<16x256xf32, #tpu.memory_space<vmem>>, vector<16x256xf32>
      %c0_17 = arith.constant 0 : index
      %c0_18 = arith.constant 0 : index
      %22 = vector.load %arg5[%c0_17, %c0_18] : memref<1x256xf32, #tpu.memory_space<vmem>>, vector<1x256xf32>
      %23 = vector.broadcast %22 : vector<1x256xf32> to vector<16x256xf32>
      %24 = arith.addf %21, %23 : vector<16x256xf32>
      %c0_19 = arith.constant 0 : index
      %c0_20 = arith.constant 0 : index
      %25 = vector.load %arg11[%c0_19, %c0_20] : memref<16x128xf32, #tpu.memory_space<vmem>>, vector<16x128xf32>
      %26 = arith.truncf %24 : vector<16x256xf32> to vector<16x256xbf16>
      %c0_21 = arith.constant 0 : index
      %c0_22 = arith.constant 0 : index
      %27 = vector.load %arg6[%c0_21, %c0_22] : memref<256x128xbf16, #tpu.memory_space<vmem>>, vector<256x128xbf16>
      %cst_23 = arith.constant dense<0.000000e+00> : vector<16x128xf32>
      %28 = tpu.matmul %26, %27, %cst_23 {dimension_numbers = #tpu.dot_dimension_numbers<[1], [0], [0], [1], [0, 0, 1, 1], [], []>} : vector<16x256xbf16>, vector<256x128xbf16>, vector<16x128xf32> -> vector<16x128xf32>
      %29 = arith.addf %25, %28 : vector<16x128xf32>
      %c0_24 = arith.constant 0 : index
      %c0_25 = arith.constant 0 : index
      %30 = vector.load %arg11[%c0_24, %c0_25] : memref<16x128xf32, #tpu.memory_space<vmem>>, vector<16x128xf32>
      tpu.vector_store %arg11[%c0_24, %c0_25], %29 {strides = array<i32>} : memref<16x128xf32, #tpu.memory_space<vmem>>, vector<16x128xf32>,
      %c0_26 = arith.constant 0 : index
      %c0_27 = arith.constant 0 : index
      %31 = vector.load %arg12[%c0_26, %c0_27] : memref<16x1xf32, #tpu.memory_space<vmem>>, vector<16x1xf32>
      %32 = arith.mulf %24, %24 : vector<16x256xf32>
      %cst_28 = arith.constant dense<0.000000e+00> : vector<16xf32>
      %33 = vector.multi_reduction <add>, %32, %cst_28 [1] : vector<16x256xf32> to vector<16xf32>
      %34 = vector.shape_cast %33 : vector<16xf32> to vector<16x1xf32>
      %35 = arith.addf %31, %34 : vector<16x1xf32>
      %c0_29 = arith.constant 0 : index
      %c0_30 = arith.constant 0 : index
      %36 = vector.load %arg12[%c0_29, %c0_30] : memref<16x1xf32, #tpu.memory_space<vmem>>, vector<16x1xf32>
      tpu.vector_store %arg12[%c0_29, %c0_30], %35 {strides = array<i32>} : memref<16x1xf32, #tpu.memory_space<vmem>>, vector<16x1xf32>,
    } else {
    }
    %c0_i32_13 = arith.constant 0 : i32
    %17 = arith.cmpi eq, %arg1, %c0_i32_13 : i32
    %18 = arith.andi %14, %17 : i1
    %19 = arith.extui %18 : i1 to i32
    %c0_i32_14 = arith.constant 0 : i32
    %20 = arith.cmpi ne, %19, %c0_i32_14 : i32
    scf.if %20 {
      %c0_15 = arith.constant 0 : index
      %c0_16 = arith.constant 0 : index
      %21 = vector.load %arg11[%c0_15, %c0_16] : memref<16x128xf32, #tpu.memory_space<vmem>>, vector<16x128xf32>
      %c0_17 = arith.constant 0 : index
      %c0_18 = arith.constant 0 : index
      %22 = vector.load %arg7[%c0_17, %c0_18] : memref<1x128xf32, #tpu.memory_space<vmem>>, vector<1x128xf32>
      %23 = vector.broadcast %22 : vector<1x128xf32> to vector<16x128xf32>
      %24 = arith.addf %21, %23 : vector<16x128xf32>
      %c0_19 = arith.constant 0 : index
      %c0_20 = arith.constant 0 : index
      %25 = vector.load %arg8[%c0_19, %c0_20] : memref<16x128xf32, #tpu.memory_space<vmem>>, vector<16x128xf32>
      tpu.vector_store %arg8[%c0_19, %c0_20], %24 {strides = array<i32>} : memref<16x128xf32, #tpu.memory_space<vmem>>, vector<16x128xf32>,
      %c0_21 = arith.constant 0 : index
      %c0_22 = arith.constant 0 : index
      %26 = vector.load %arg12[%c0_21, %c0_22] : memref<16x1xf32, #tpu.memory_space<vmem>>, vector<16x1xf32>
      %c16_i32 = arith.constant 16 : i32
      %27 = arith.muli %arg0, %c16_i32 : i32
      %28 = tpu.iota {dimensions = array<i32: 0>} : vector<16x1xi32>
      %29 = vector.broadcast %27 : i32 to vector<16x1xi32>
      %30 = arith.addi %29, %28 : vector<16x1xi32>
      %c2_i32 = arith.constant 2 : i32
      %31 = vector.broadcast %c2_i32 : i32 to vector<16x1xi32>
      %32 = arith.cmpi slt, %30, %31 : vector<16x1xi32>
      %cst_23 = arith.constant 0.000000e+00 : f32
      %33 = vector.broadcast %cst_23 : f32 to vector<16x1xf32>
      %34 = arith.select %32, %26, %33 : vector<16x1xi1>, vector<16x1xf32>
      %cst_24 = arith.constant dense<0.000000e+00> : vector<1xf32>
      %35 = vector.multi_reduction <add>, %34, %cst_24 [0] : vector<16x1xf32> to vector<1xf32>
      %36 = vector.shape_cast %35 : vector<1xf32> to vector<1x1xf32>
      %cst_25 = arith.constant 0.000000e+00 : f32
      %37 = vector.broadcast %cst_25 : f32 to vector<8x128xf32>
      %38 = vector.broadcast %36 : vector<1x1xf32> to vector<8x128xf32>
      %39 = arith.addf %37, %38 : vector<8x128xf32>
      %c0_26 = arith.constant 0 : index
      %c0_27 = arith.constant 0 : index
      %40 = vector.load %arg9[%c0_26, %c0_27] : memref<8x128xf32, #tpu.memory_space<vmem>>, vector<8x128xf32>
      tpu.vector_store %arg9[%c0_26, %c0_27], %39 {strides = array<i32>} : memref<8x128xf32, #tpu.memory_space<vmem>>, vector<8x128xf32>,
    } else {
    }
    return
  }
  func.func @transform_0(%arg0: i32, %arg1: i32, %arg2: i32) -> (i32, i32) {
    %c0_i32 = arith.constant 0 : i32
    return %arg0, %arg2 : i32, i32
  }
  func.func @transform_1(%arg0: i32, %arg1: i32, %arg2: i32) -> (i32, i32) {
    %c0_i32 = arith.constant 0 : i32
    return %arg2, %arg1 : i32, i32
  }
  func.func @transform_2(%arg0: i32, %arg1: i32, %arg2: i32) -> (i32, i32) {
    %c0_i32 = arith.constant 0 : i32
    %c0_i32_0 = arith.constant 0 : i32
    return %c0_i32, %arg1 : i32, i32
  }
  func.func @transform_3(%arg0: i32, %arg1: i32, %arg2: i32) -> (i32, i32) {
    %c0_i32 = arith.constant 0 : i32
    %c0_i32_0 = arith.constant 0 : i32
    return %arg1, %c0_i32 : i32, i32
  }
  func.func @transform_4(%arg0: i32, %arg1: i32, %arg2: i32) -> (i32, i32) {
    %c0_i32 = arith.constant 0 : i32
    %c0_i32_0 = arith.constant 0 : i32
    %c0_i32_1 = arith.constant 0 : i32
    return %c0_i32, %c0_i32_0 : i32, i32
  }
  func.func @transform_5(%arg0: i32, %arg1: i32, %arg2: i32) -> (i32, i32) {
    %c0_i32 = arith.constant 0 : i32
    %c0_i32_0 = arith.constant 0 : i32
    return %arg0, %c0_i32 : i32, i32
  }
  func.func @transform_6(%arg0: i32, %arg1: i32, %arg2: i32) -> (i32, i32) {
    %c0_i32 = arith.constant 0 : i32
    %c0_i32_0 = arith.constant 0 : i32
    return %arg0, %c0_i32 : i32, i32
  }
}

</mosaic_0001>

<llo_original>
// kernel: tpu_custom_call.1
$region0: #{tpu_custom_call.1}
  #allocation0 [shape = 'u32[]', space=smem, size = 0x4, offset = 0x4, fixed_abs, tag = 'smem constant byte address 0x4 - core index']
  #allocation1 [shape = 'u32[72,128]{1,0:T(1,128)}', space=vmem, size = 0x9000, scoped, tag = 'internal scratch']
  #allocation2 [shape = 'f32[16,256]{1,0:T(8,128)}', space=vmem, size = 0x4000, scoped, tag = 'scratch operand']
  #allocation3 [shape = 'f32[16,128]{1,0:T(8,128)}', space=vmem, size = 0x2000, scoped, tag = 'scratch operand']
  #allocation4 [shape = 'f32[16,1]{1,0:T(8,128)}', space=vmem, size = 0x2000, scoped, tag = 'scratch operand']
  %s0 = inlined_call_operand.hbm [shape: bf16[16,1024], index: 0, kind: input, shape index: {}]
  %s1 = inlined_call_operand.hbm [shape: bf16[1024,256], index: 1, kind: input, shape index: {}]
  %s2 = inlined_call_operand.hbm [shape: f32[1,256], index: 2, kind: input, shape index: {}]
  %s3 = inlined_call_operand.hbm [shape: bf16[256,128], index: 3, kind: input, shape index: {}]
  %s4 = inlined_call_operand.vmem [shape: f32[1,128], index: 4, kind: input, shape index: {}]
  %s5 = inlined_call_operand.hbm [shape: f32[16,128], index: 5, kind: output, shape index: {0}]
  %s6 = inlined_call_operand.hbm [shape: f32[8,128], index: 6, kind: output, shape index: {1}]
  %7 = xla_tuple %s5, %s6
  %s8 = sld [smem:[#allocation0]]
  $region70: #{tpu_custom_call.1} parent=0
    _
  %s10 = ssub.s32 1, %s8
  %s11 = scalar_select 0, %s10, %s8
  $region1: #{tpu_custom_call.1} parent=0
    #allocation5 [shape = 'u8[32768]{0}', space=vmem, size = 0x8000, scoped, tag = 'input window, operand 0, single buffered']
    #allocation6 [shape = 's32[1]{0}', space=sflag, size = 0x4, scoped, tag = 'scoped memory for tpu_custom_call.1']
    #allocation7 [shape = 's32[1]{0}', space=sflag, size = 0x4, scoped, tag = 'scoped memory for tpu_custom_call.1']
    #allocation8 [shape = 'u8[524288]{0}', space=vmem, size = 0x80000, scoped, tag = 'input window, operand 1, single buffered']
    #allocation9 [shape = 's32[1]{0}', space=sflag, size = 0x4, scoped, tag = 'scoped memory for tpu_custom_call.1']
    #allocation10 [shape = 'u8[1024]{0}', space=vmem, size = 0x400, scoped, tag = 'input window, operand 2, single buffered']
    #allocation11 [shape = 'u8[65536]{0}', space=vmem, size = 0x10000, scoped, tag = 'input window, operand 3, single buffered']
    #allocation12 [shape = 's32[1]{0}', space=sflag, size = 0x4, scoped, tag = 'scoped memory for tpu_custom_call.1']
    #allocation13 [shape = 'u8[8192]{0}', space=vmem, size = 0x2000, scoped, tag = 'output window, operand 0, single buffered']
    #allocation14 [shape = 'u8[4096]{0}', space=vmem, size = 0x1000, scoped, tag = 'output window, operand 1, single buffered']
    #allocation15 [shape = 's32[1]{0}', space=sflag, size = 0x4, scoped, tag = 'scoped memory for tpu_custom_call.1']
    %12 = vsyncpa [#allocation6], 0
    %13 = vsyncpa [#allocation9], 0
    %14 = vsyncpa [#allocation12], 0
    %15 = vsyncpa [#allocation7], 0
    %16 = vsyncpa [#allocation15], 0
    // Predicated region
    $region2: #{tpu_custom_call.1} parent=1 // pred_check
      _
    $region3: #{tpu_custom_call.1} parent=1 // pred_check_branch
      %18 = sbr.rel (0) target = $region5
    $region4: #{tpu_custom_call.1} parent=1 // pred_region
      %20 = vsyncadd [#allocation6], 0
      %s21 = sshll.u32 %s0, 4
      %s22 = int_to_ptr.hbm [resolvable:$true] %s21
      %s23 = sshll.u32 [#allocation5], 4
      %s24 = int_to_ptr.vmem [resolvable:$true] %s23
      %29 = dma.hbm_to_vmem [thread:$0]  %s22, 1024, %s24, [#allocation6], 512, 512, 32
    $region5: #{tpu_custom_call.1} parent=1 // pred_fallthru
      _
    // Predicated region
    $region6: #{tpu_custom_call.1} parent=1 // pred_check
      _
    $region7: #{tpu_custom_call.1} parent=1 // pred_check_branch
      %31 = sbr.rel (0) target = $region9
    $region8: #{tpu_custom_call.1} parent=1 // pred_region
      %33 = vsyncadd [#allocation9], 0
      %s34 = sshll.u32 %s1, 4
      %s35 = int_to_ptr.hbm [resolvable:$true] %s34
      %s36 = sshll.u32 [#allocation8], 4
      %s37 = int_to_ptr.vmem [resolvable:$true] %s36
      %42 = dma.hbm_to_vmem [thread:$0]  %s35, 16384, %s37, [#allocation9], 128, 128, 8
    $region9: #{tpu_custom_call.1} parent=1 // pred_fallthru
      _
    // Predicated region
    $region10: #{tpu_custom_call.1} parent=1 // pred_check
      _
    $region11: #{tpu_custom_call.1} parent=1 // pred_check_branch
      %44 = sbr.rel (0) target = $region13
    $region12: #{tpu_custom_call.1} parent=1 // pred_region
      %46 = vsyncadd [#allocation9], 0
      %s48 = sshll.u32 %s2, 4
      %s49 = int_to_ptr.hbm [resolvable:$true] %s48
      %s50 = sshll.u32 [#allocation10], 4
      %s51 = int_to_ptr.vmem [resolvable:$true] %s50
      %53 = dma.hbm_to_vmem [thread:$0]  %s49, 32, %s51, [#allocation9]
    $region13: #{tpu_custom_call.1} parent=1 // pred_fallthru
      _
    // Predicated region
    $region14: #{tpu_custom_call.1} parent=1 // pred_check
      _
    $region15: #{tpu_custom_call.1} parent=1 // pred_check_branch
      %55 = sbr.rel (0) target = $region17
    $region16: #{tpu_custom_call.1} parent=1 // pred_region
      %57 = vsyncadd [#allocation12], 0
      %s58 = sshll.u32 %s3, 4
      %s59 = int_to_ptr.hbm [resolvable:$true] %s58
      %s60 = sshll.u32 [#allocation11], 4
      %s61 = int_to_ptr.vmem [resolvable:$true] %s60
      %66 = dma.hbm_to_vmem [thread:$0]  %s59, 2048, %s61, [#allocation12], 64, 64, 4
    $region17: #{tpu_custom_call.1} parent=1 // pred_fallthru
      _
    // Predicated region
    $region18: #{tpu_custom_call.1} parent=1 // pred_check
      _
    $region19: #{tpu_custom_call.1} parent=1 // pred_check_branch
      %68 = sbr.rel (0) target = $region21
    $region20: #{tpu_custom_call.1} parent=1 // pred_region
      _
    $region21: #{tpu_custom_call.1} parent=1 // pred_fallthru
      _
    // Predicated region
    $region22: #{tpu_custom_call.1} parent=1 // pred_check
      _
    $region23: #{tpu_custom_call.1} parent=1 // pred_check_branch
      %70 = sbr.rel (0) target = $region25
    $region24: #{tpu_custom_call.1} parent=1 // pred_region
      %72 = dma.done [#allocation6], 1024
    $region25: #{tpu_custom_call.1} parent=1 // pred_fallthru
      _
    // Predicated region
    $region26: #{tpu_custom_call.1} parent=1 // pred_check
      _
    $region27: #{tpu_custom_call.1} parent=1 // pred_check_branch
      %74 = sbr.rel (0) target = $region29
    $region28: #{tpu_custom_call.1} parent=1 // pred_region
      %76 = dma.done [#allocation9], 16384
    $region29: #{tpu_custom_call.1} parent=1 // pred_fallthru
      _
    // Predicated region
    $region30: #{tpu_custom_call.1} parent=1 // pred_check
      _
    $region31: #{tpu_custom_call.1} parent=1 // pred_check_branch
      %78 = sbr.rel (0) target = $region33
    $region32: #{tpu_custom_call.1} parent=1 // pred_region
      %80 = dma.done [#allocation9], 32
    $region33: #{tpu_custom_call.1} parent=1 // pred_fallthru
      _
    // Predicated region
    $region34: #{tpu_custom_call.1} parent=1 // pred_check
      _
    $region35: #{tpu_custom_call.1} parent=1 // pred_check_branch
      %82 = sbr.rel (0) target = $region37
    $region36: #{tpu_custom_call.1} parent=1 // pred_region
      %84 = dma.done [#allocation12], 2048
    $region37: #{tpu_custom_call.1} parent=1 // pred_fallthru
      _
    %p85 = scmp.eq.s32.totalorder 0, 0
    // Predicated region
    $region38: #{tpu_custom_call.1} parent=1 // pred_check
      %p86 = pneg %p85
    $region39: #{tpu_custom_call.1} parent=1 // pred_check_branch
      %88 = sbr.rel (%p86) target = $region41
    $region40: #{tpu_custom_call.1} parent=1 // pred_region
      %89 = vst [vmem:[#allocation2] sm:$0xff] 0.0
      %90 = vst [vmem:[#allocation2 + $0x8] sm:$0xff] 0.0
      %91 = vst [vmem:[#allocation2 + $0x10] sm:$0xff] 0.0
      %92 = vst [vmem:[#allocation2 + $0x18] sm:$0xff] 0.0
    $region41: #{tpu_custom_call.1} parent=1 // pred_fallthru
      _
    %p93 = scmp.eq.s32.totalorder 0, 0
    %p94 = pnand %p93, %p85
    %p95 = pneg %p94
    // Predicated region
    $region42: #{tpu_custom_call.1} parent=1 // pred_check
      _
    $region43: #{tpu_custom_call.1} parent=1 // pred_check_branch
      %97 = sbr.rel (%p94) target = $region45
    $region44: #{tpu_custom_call.1} parent=1 // pred_region
      %98 = vst [vmem:[#allocation3] sm:$0xff] 0.0
      %99 = vst [vmem:[#allocation3 + $0x8] sm:$0xff] 0.0
      %vm100 = vcmask 7168
      %101 = vst.msk [vmem:[#allocation4] sm:$0xff] %vm100, 0.0
      %102 = vst.msk [vmem:[#allocation4 + $0x8] sm:$0xff] %vm100, 0.0
    $region45: #{tpu_custom_call.1} parent=1 // pred_fallthru
      _
    %v103 = vld [vmem:[#allocation2] sm:$0xff]
    %v104 = vld [vmem:[#allocation2 + $0x8] sm:$0xff]
    %v105 = vld [vmem:[#allocation2 + $0x10] sm:$0xff]
    %v106 = vld [vmem:[#allocation2 + $0x18] sm:$0xff]
    %v107 = vld [vmem:[#allocation5] sm:$0xff]
    %v108 = vld [vmem:[#allocation5 + $0x8] sm:$0xff]
    %v109 = vld [vmem:[#allocation5 + $0x10] sm:$0xff]
    %v110 = vld [vmem:[#allocation5 + $0x18] sm:$0xff]
    %v111 = vld [vmem:[#allocation5 + $0x20] sm:$0xff]
    %v112 = vld [vmem:[#allocation5 + $0x28] sm:$0xff]
    %v113 = vld [vmem:[#allocation5 + $0x30] sm:$0xff]
    %v114 = vld [vmem:[#allocation5 + $0x38] sm:$0xff]
    %v115 = vld [vmem:[#allocation8] sm:$0xff]
    %v116 = vld [vmem:[#allocation8 + $0x8] sm:$0xff]
    %v117 = vld [vmem:[#allocation8 + $0x10] sm:$0xff]
    %v118 = vld [vmem:[#allocation8 + $0x18] sm:$0xff]
    %v119 = vld [vmem:[#allocation8 + $0x20] sm:$0xff]
    %v120 = vld [vmem:[#allocation8 + $0x28] sm:$0xff]
    %v121 = vld [vmem:[#allocation8 + $0x30] sm:$0xff]
    %v122 = vld [vmem:[#allocation8 + $0x38] sm:$0xff]
    %v123 = vld [vmem:[#allocation8 + $0x40] sm:$0xff]
    %v124 = vld [vmem:[#allocation8 + $0x48] sm:$0xff]
    %v125 = vld [vmem:[#allocation8 + $0x50] sm:$0xff]
    %v126 = vld [vmem:[#allocation8 + $0x58] sm:$0xff]
    %v127 = vld [vmem:[#allocation8 + $0x60] sm:$0xff]
    %v128 = vld [vmem:[#allocation8 + $0x68] sm:$0xff]
    %v129 = vld [vmem:[#allocation8 + $0x70] sm:$0xff]
    %v130 = vld [vmem:[#allocation8 + $0x78] sm:$0xff]
    %v131 = vld [vmem:[#allocation8 + $0x80] sm:$0xff]
    %v132 = vld [vmem:[#allocation8 + $0x88] sm:$0xff]
    %v133 = vld [vmem:[#allocation8 + $0x90] sm:$0xff]
    %v134 = vld [vmem:[#allocation8 + $0x98] sm:$0xff]
    %v135 = vld [vmem:[#allocation8 + $0xa0] sm:$0xff]
    %v136 = vld [vmem:[#allocation8 + $0xa8] sm:$0xff]
    %v137 = vld [vmem:[#allocation8 + $0xb0] sm:$0xff]
    %v138 = vld [vmem:[#allocation8 + $0xb8] sm:$0xff]
    %v139 = vld [vmem:[#allocation8 + $0xc0] sm:$0xff]
    %v140 = vld [vmem:[#allocation8 + $0xc8] sm:$0xff]
    %v141 = vld [vmem:[#allocation8 + $0xd0] sm:$0xff]
    %v142 = vld [vmem:[#allocation8 + $0xd8] sm:$0xff]
    %v143 = vld [vmem:[#allocation8 + $0xe0] sm:$0xff]
    %v144 = vld [vmem:[#allocation8 + $0xe8] sm:$0xff]
    %v145 = vld [vmem:[#allocation8 + $0xf0] sm:$0xff]
    %v146 = vld [vmem:[#allocation8 + $0xf8] sm:$0xff]
    %v147 = vld [vmem:[#allocation8 + $0x100] sm:$0xff]
    %v148 = vld [vmem:[#allocation8 + $0x108] sm:$0xff]
    %v149 = vld [vmem:[#allocation8 + $0x110] sm:$0xff]
    %v150 = vld [vmem:[#allocation8 + $0x118] sm:$0xff]
    %v151 = vld [vmem:[#allocation8 + $0x120] sm:$0xff]
    %v152 = vld [vmem:[#allocation8 + $0x128] sm:$0xff]
    %v153 = vld [vmem:[#allocation8 + $0x130] sm:$0xff]
    %v154 = vld [vmem:[#allocation8 + $0x138] sm:$0xff]
    %v155 = vld [vmem:[#allocation8 + $0x140] sm:$0xff]
    %v156 = vld [vmem:[#allocation8 + $0x148] sm:$0xff]
    %v157 = vld [vmem:[#allocation8 + $0x150] sm:$0xff]
    %v158 = vld [vmem:[#allocation8 + $0x158] sm:$0xff]
    %v159 = vld [vmem:[#allocation8 + $0x160] sm:$0xff]
    %v160 = vld [vmem:[#allocation8 + $0x168] sm:$0xff]
    %v161 = vld [vmem:[#allocation8 + $0x170] sm:$0xff]
    %v162 = vld [vmem:[#allocation8 + $0x178] sm:$0xff]
    %v163 = vld [vmem:[#allocation8 + $0x180] sm:$0xff]
    %v164 = vld [vmem:[#allocation8 + $0x188] sm:$0xff]
    %v165 = vld [vmem:[#allocation8 + $0x190] sm:$0xff]
    %v166 = vld [vmem:[#allocation8 + $0x198] sm:$0xff]
    %v167 = vld [vmem:[#allocation8 + $0x1a0] sm:$0xff]
    %v168 = vld [vmem:[#allocation8 + $0x1a8] sm:$0xff]
    %v169 = vld [vmem:[#allocation8 + $0x1b0] sm:$0xff]
    %v170 = vld [vmem:[#allocation8 + $0x1b8] sm:$0xff]
    %v171 = vld [vmem:[#allocation8 + $0x1c0] sm:$0xff]
    %v172 = vld [vmem:[#allocation8 + $0x1c8] sm:$0xff]
    %v173 = vld [vmem:[#allocation8 + $0x1d0] sm:$0xff]
    %v174 = vld [vmem:[#allocation8 + $0x1d8] sm:$0xff]
    %v175 = vld [vmem:[#allocation8 + $0x1e0] sm:$0xff]
    %v176 = vld [vmem:[#allocation8 + $0x1e8] sm:$0xff]
    %v177 = vld [vmem:[#allocation8 + $0x1f0] sm:$0xff]
    %v178 = vld [vmem:[#allocation8 + $0x1f8] sm:$0xff]
    %v179 = vld [vmem:[#allocation8 + $0x200] sm:$0xff]
    %v180 = vld [vmem:[#allocation8 + $0x208] sm:$0xff]
    %v181 = vld [vmem:[#allocation8 + $0x210] sm:$0xff]
    %v182 = vld [vmem:[#allocation8 + $0x218] sm:$0xff]
    %v183 = vld [vmem:[#allocation8 + $0x220] sm:$0xff]
    %v184 = vld [vmem:[#allocation8 + $0x228] sm:$0xff]
    %v185 = vld [vmem:[#allocation8 + $0x230] sm:$0xff]
    %v186 = vld [vmem:[#allocation8 + $0x238] sm:$0xff]
    %v187 = vld [vmem:[#allocation8 + $0x240] sm:$0xff]
    %v188 = vld [vmem:[#allocation8 + $0x248] sm:$0xff]
    %v189 = vld [vmem:[#allocation8 + $0x250] sm:$0xff]
    %v190 = vld [vmem:[#allocation8 + $0x258] sm:$0xff]
    %v191 = vld [vmem:[#allocation8 + $0x260] sm:$0xff]
    %v192 = vld [vmem:[#allocation8 + $0x268] sm:$0xff]
    %v193 = vld [vmem:[#allocation8 + $0x270] sm:$0xff]
    %v194 = vld [vmem:[#allocation8 + $0x278] sm:$0xff]
    %v195 = vld [vmem:[#allocation8 + $0x280] sm:$0xff]
    %v196 = vld [vmem:[#allocation8 + $0x288] sm:$0xff]
    %v197 = vld [vmem:[#allocation8 + $0x290] sm:$0xff]
    %v198 = vld [vmem:[#allocation8 + $0x298] sm:$0xff]
    %v199 = vld [vmem:[#allocation8 + $0x2a0] sm:$0xff]
    %v200 = vld [vmem:[#allocation8 + $0x2a8] sm:$0xff]
    %v201 = vld [vmem:[#allocation8 + $0x2b0] sm:$0xff]
    %v202 = vld [vmem:[#allocation8 + $0x2b8] sm:$0xff]
    %v203 = vld [vmem:[#allocation8 + $0x2c0] sm:$0xff]
    %v204 = vld [vmem:[#allocation8 + $0x2c8] sm:$0xff]
    %v205 = vld [vmem:[#allocation8 + $0x2d0] sm:$0xff]
    %v206 = vld [vmem:[#allocation8 + $0x2d8] sm:$0xff]
    %v207 = vld [vmem:[#allocation8 + $0x2e0] sm:$0xff]
    %v208 = vld [vmem:[#allocation8 + $0x2e8] sm:$0xff]
    %v209 = vld [vmem:[#allocation8 + $0x2f0] sm:$0xff]
    %v210 = vld [vmem:[#allocation8 + $0x2f8] sm:$0xff]
    %v211 = vld [vmem:[#allocation8 + $0x300] sm:$0xff]
    %v212 = vld [vmem:[#allocation8 + $0x308] sm:$0xff]
    %v213 = vld [vmem:[#allocation8 + $0x310] sm:$0xff]
    %v214 = vld [vmem:[#allocation8 + $0x318] sm:$0xff]
    %v215 = vld [vmem:[#allocation8 + $0x320] sm:$0xff]
    %v216 = vld [vmem:[#allocation8 + $0x328] sm:$0xff]
    %v217 = vld [vmem:[#allocation8 + $0x330] sm:$0xff]
    %v218 = vld [vmem:[#allocation8 + $0x338] sm:$0xff]
    %v219 = vld [vmem:[#allocation8 + $0x340] sm:$0xff]
    %v220 = vld [vmem:[#allocation8 + $0x348] sm:$0xff]
    %v221 = vld [vmem:[#allocation8 + $0x350] sm:$0xff]
    %v222 = vld [vmem:[#allocation8 + $0x358] sm:$0xff]
    %v223 = vld [vmem:[#allocation8 + $0x360] sm:$0xff]
    %v224 = vld [vmem:[#allocation8 + $0x368] sm:$0xff]
    %v225 = vld [vmem:[#allocation8 + $0x370] sm:$0xff]
    %v226 = vld [vmem:[#allocation8 + $0x378] sm:$0xff]
    %v227 = vld [vmem:[#allocation8 + $0x380] sm:$0xff]
    %v228 = vld [vmem:[#allocation8 + $0x388] sm:$0xff]
    %v229 = vld [vmem:[#allocation8 + $0x390] sm:$0xff]
    %v230 = vld [vmem:[#allocation8 + $0x398] sm:$0xff]
    %v231 = vld [vmem:[#allocation8 + $0x3a0] sm:$0xff]
    %v232 = vld [vmem:[#allocation8 + $0x3a8] sm:$0xff]
    %v233 = vld [vmem:[#allocation8 + $0x3b0] sm:$0xff]
    %v234 = vld [vmem:[#allocation8 + $0x3b8] sm:$0xff]
    %v235 = vld [vmem:[#allocation8 + $0x3c0] sm:$0xff]
    %v236 = vld [vmem:[#allocation8 + $0x3c8] sm:$0xff]
    %v237 = vld [vmem:[#allocation8 + $0x3d0] sm:$0xff]
    %v238 = vld [vmem:[#allocation8 + $0x3d8] sm:$0xff]
    %v239 = vld [vmem:[#allocation8 + $0x3e0] sm:$0xff]
    %v240 = vld [vmem:[#allocation8 + $0x3e8] sm:$0xff]
    %v241 = vld [vmem:[#allocation8 + $0x3f0] sm:$0xff]
    %v242 = vld [vmem:[#allocation8 + $0x3f8] sm:$0xff]
    %v251 = vunpack.c.l.b16 %v107
    %v252 = vunpack.c.h.b16 %v107
    %v253 = vunpack.c.l.b16 %v108
    %v254 = vunpack.c.h.b16 %v108
    %v255 = vunpack.c.l.b16 %v109
    %v256 = vunpack.c.h.b16 %v109
    %v257 = vunpack.c.l.b16 %v110
    %v258 = vunpack.c.h.b16 %v110
    %v259 = vunpack.c.l.b16 %v111
    %v260 = vunpack.c.h.b16 %v111
    %v261 = vunpack.c.l.b16 %v112
    %v262 = vunpack.c.h.b16 %v112
    %v263 = vunpack.c.l.b16 %v113
    %v264 = vunpack.c.h.b16 %v113
    %v265 = vunpack.c.l.b16 %v114
    %v266 = vunpack.c.h.b16 %v114
    %v267 = vpack.c.b16 %v259, %v251
    %v268 = vpack.c.b16 %v260, %v252
    %v269 = vpack.c.b16 %v261, %v253
    %v270 = vpack.c.b16 %v262, %v254
    %v271 = vpack.c.b16 %v263, %v255
    %v272 = vpack.c.b16 %v264, %v256
    %v273 = vpack.c.b16 %v265, %v257
    %v274 = vpack.c.b16 %v266, %v258
    %v411 = vunpack.c.l.b16 %v115
    %v412 = vunpack.c.h.b16 %v115
    %v413 = vunpack.c.l.b16 %v116
    %v414 = vunpack.c.h.b16 %v116
    %v415 = vunpack.c.l.b16 %v117
    %v416 = vunpack.c.h.b16 %v117
    %v417 = vunpack.c.l.b16 %v118
    %v418 = vunpack.c.h.b16 %v118
    %v419 = vunpack.c.l.b16 %v119
    %v420 = vunpack.c.h.b16 %v119
    %v421 = vunpack.c.l.b16 %v120
    %v422 = vunpack.c.h.b16 %v120
    %v423 = vunpack.c.l.b16 %v121
    %v424 = vunpack.c.h.b16 %v121
    %v425 = vunpack.c.l.b16 %v122
    %v426 = vunpack.c.h.b16 %v122
    %v427 = vunpack.c.l.b16 %v123
    %v428 = vunpack.c.h.b16 %v123
    %v429 = vunpack.c.l.b16 %v124
    %v430 = vunpack.c.h.b16 %v124
    %v431 = vunpack.c.l.b16 %v125
    %v432 = vunpack.c.h.b16 %v125
    %v433 = vunpack.c.l.b16 %v126
    %v434 = vunpack.c.h.b16 %v126
    %v435 = vunpack.c.l.b16 %v127
    %v436 = vunpack.c.h.b16 %v127
    %v437 = vunpack.c.l.b16 %v128
    %v438 = vunpack.c.h.b16 %v128
    %v439 = vunpack.c.l.b16 %v129
    %v440 = vunpack.c.h.b16 %v129
    %v441 = vunpack.c.l.b16 %v130
    %v442 = vunpack.c.h.b16 %v130
    %v443 = vunpack.c.l.b16 %v131
    %v444 = vunpack.c.h.b16 %v131
    %v445 = vunpack.c.l.b16 %v132
    %v446 = vunpack.c.h.b16 %v132
    %v447 = vunpack.c.l.b16 %v133
    %v448 = vunpack.c.h.b16 %v133
    %v449 = vunpack.c.l.b16 %v134
    %v450 = vunpack.c.h.b16 %v134
    %v451 = vunpack.c.l.b16 %v135
    %v452 = vunpack.c.h.b16 %v135
    %v453 = vunpack.c.l.b16 %v136
    %v454 = vunpack.c.h.b16 %v136
    %v455 = vunpack.c.l.b16 %v137
    %v456 = vunpack.c.h.b16 %v137
    %v457 = vunpack.c.l.b16 %v138
    %v458 = vunpack.c.h.b16 %v138
    %v459 = vunpack.c.l.b16 %v139
    %v460 = vunpack.c.h.b16 %v139
    %v461 = vunpack.c.l.b16 %v140
    %v462 = vunpack.c.h.b16 %v140
    %v463 = vunpack.c.l.b16 %v141
    %v464 = vunpack.c.h.b16 %v141
    %v465 = vunpack.c.l.b16 %v142
    %v466 = vunpack.c.h.b16 %v142
    %v467 = vunpack.c.l.b16 %v143
    %v468 = vunpack.c.h.b16 %v143
    %v469 = vunpack.c.l.b16 %v144
    %v470 = vunpack.c.h.b16 %v144
    %v471 = vunpack.c.l.b16 %v145
    %v472 = vunpack.c.h.b16 %v145
    %v473 = vunpack.c.l.b16 %v146
    %v474 = vunpack.c.h.b16 %v146
    %v475 = vunpack.c.l.b16 %v147
    %v476 = vunpack.c.h.b16 %v147
    %v477 = vunpack.c.l.b16 %v148
    %v478 = vunpack.c.h.b16 %v148
    %v479 = vunpack.c.l.b16 %v149
    %v480 = vunpack.c.h.b16 %v149
    %v481 = vunpack.c.l.b16 %v150
    %v482 = vunpack.c.h.b16 %v150
    %v483 = vunpack.c.l.b16 %v151
    %v484 = vunpack.c.h.b16 %v151
    %v485 = vunpack.c.l.b16 %v152
    %v486 = vunpack.c.h.b16 %v152
    %v487 = vunpack.c.l.b16 %v153
    %v488 = vunpack.c.h.b16 %v153
    %v489 = vunpack.c.l.b16 %v154
    %v490 = vunpack.c.h.b16 %v154
    %v491 = vunpack.c.l.b16 %v155
    %v492 = vunpack.c.h.b16 %v155
    %v493 = vunpack.c.l.b16 %v156
    %v494 = vunpack.c.h.b16 %v156
    %v495 = vunpack.c.l.b16 %v157
    %v496 = vunpack.c.h.b16 %v157
    %v497 = vunpack.c.l.b16 %v158
    %v498 = vunpack.c.h.b16 %v158
    %v499 = vunpack.c.l.b16 %v159
    %v500 = vunpack.c.h.b16 %v159
    %v501 = vunpack.c.l.b16 %v160
    %v502 = vunpack.c.h.b16 %v160
    %v503 = vunpack.c.l.b16 %v161
    %v504 = vunpack.c.h.b16 %v161
    %v505 = vunpack.c.l.b16 %v162
    %v506 = vunpack.c.h.b16 %v162
    %v507 = vunpack.c.l.b16 %v163
    %v508 = vunpack.c.h.b16 %v163
    %v509 = vunpack.c.l.b16 %v164
    %v510 = vunpack.c.h.b16 %v164
    %v511 = vunpack.c.l.b16 %v165
    %v512 = vunpack.c.h.b16 %v165
    %v513 = vunpack.c.l.b16 %v166
    %v514 = vunpack.c.h.b16 %v166
    %v515 = vunpack.c.l.b16 %v167
    %v516 = vunpack.c.h.b16 %v167
    %v517 = vunpack.c.l.b16 %v168
    %v518 = vunpack.c.h.b16 %v168
    %v519 = vunpack.c.l.b16 %v169
    %v520 = vunpack.c.h.b16 %v169
    %v521 = vunpack.c.l.b16 %v170
    %v522 = vunpack.c.h.b16 %v170
    %v523 = vunpack.c.l.b16 %v171
    %v524 = vunpack.c.h.b16 %v171
    %v525 = vunpack.c.l.b16 %v172
    %v526 = vunpack.c.h.b16 %v172
    %v527 = vunpack.c.l.b16 %v173
    %v528 = vunpack.c.h.b16 %v173
    %v529 = vunpack.c.l.b16 %v174
    %v530 = vunpack.c.h.b16 %v174
    %v531 = vunpack.c.l.b16 %v175
    %v532 = vunpack.c.h.b16 %v175
    %v533 = vunpack.c.l.b16 %v176
    %v534 = vunpack.c.h.b16 %v176
    %v535 = vunpack.c.l.b16 %v177
    %v536 = vunpack.c.h.b16 %v177
    %v537 = vunpack.c.l.b16 %v178
    %v538 = vunpack.c.h.b16 %v178
    %v539 = vunpack.c.l.b16 %v179
    %v540 = vunpack.c.h.b16 %v179
    %v541 = vunpack.c.l.b16 %v180
    %v542 = vunpack.c.h.b16 %v180
    %v543 = vunpack.c.l.b16 %v181
    %v544 = vunpack.c.h.b16 %v181
    %v545 = vunpack.c.l.b16 %v182
    %v546 = vunpack.c.h.b16 %v182
    %v547 = vunpack.c.l.b16 %v183
    %v548 = vunpack.c.h.b16 %v183
    %v549 = vunpack.c.l.b16 %v184
    %v550 = vunpack.c.h.b16 %v184
    %v551 = vunpack.c.l.b16 %v185
    %v552 = vunpack.c.h.b16 %v185
    %v553 = vunpack.c.l.b16 %v186
    %v554 = vunpack.c.h.b16 %v186
    %v555 = vunpack.c.l.b16 %v187
    %v556 = vunpack.c.h.b16 %v187
    %v557 = vunpack.c.l.b16 %v188
    %v558 = vunpack.c.h.b16 %v188
    %v559 = vunpack.c.l.b16 %v189
    %v560 = vunpack.c.h.b16 %v189
    %v561 = vunpack.c.l.b16 %v190
    %v562 = vunpack.c.h.b16 %v190
    %v563 = vunpack.c.l.b16 %v191
    %v564 = vunpack.c.h.b16 %v191
    %v565 = vunpack.c.l.b16 %v192
    %v566 = vunpack.c.h.b16 %v192
    %v567 = vunpack.c.l.b16 %v193
    %v568 = vunpack.c.h.b16 %v193
    %v569 = vunpack.c.l.b16 %v194
    %v570 = vunpack.c.h.b16 %v194
    %v571 = vunpack.c.l.b16 %v195
    %v572 = vunpack.c.h.b16 %v195
    %v573 = vunpack.c.l.b16 %v196
    %v574 = vunpack.c.h.b16 %v196
    %v575 = vunpack.c.l.b16 %v197
    %v576 = vunpack.c.h.b16 %v197
    %v577 = vunpack.c.l.b16 %v198
    %v578 = vunpack.c.h.b16 %v198
    %v579 = vunpack.c.l.b16 %v199
    %v580 = vunpack.c.h.b16 %v199
    %v581 = vunpack.c.l.b16 %v200
    %v582 = vunpack.c.h.b16 %v200
    %v583 = vunpack.c.l.b16 %v201
    %v584 = vunpack.c.h.b16 %v201
    %v585 = vunpack.c.l.b16 %v202
    %v586 = vunpack.c.h.b16 %v202
    %v587 = vunpack.c.l.b16 %v203
    %v588 = vunpack.c.h.b16 %v203
    %v589 = vunpack.c.l.b16 %v204
    %v590 = vunpack.c.h.b16 %v204
    %v591 = vunpack.c.l.b16 %v205
    %v592 = vunpack.c.h.b16 %v205
    %v593 = vunpack.c.l.b16 %v206
    %v594 = vunpack.c.h.b16 %v206
    %v595 = vunpack.c.l.b16 %v207
    %v596 = vunpack.c.h.b16 %v207
    %v597 = vunpack.c.l.b16 %v208
    %v598 = vunpack.c.h.b16 %v208
    %v599 = vunpack.c.l.b16 %v209
    %v600 = vunpack.c.h.b16 %v209
    %v601 = vunpack.c.l.b16 %v210
    %v602 = vunpack.c.h.b16 %v210
    %v603 = vunpack.c.l.b16 %v211
    %v604 = vunpack.c.h.b16 %v211
    %v605 = vunpack.c.l.b16 %v212
    %v606 = vunpack.c.h.b16 %v212
    %v607 = vunpack.c.l.b16 %v213
    %v608 = vunpack.c.h.b16 %v213
    %v609 = vunpack.c.l.b16 %v214
    %v610 = vunpack.c.h.b16 %v214
    %v611 = vunpack.c.l.b16 %v215
    %v612 = vunpack.c.h.b16 %v215
    %v613 = vunpack.c.l.b16 %v216
    %v614 = vunpack.c.h.b16 %v216
    %v615 = vunpack.c.l.b16 %v217
    %v616 = vunpack.c.h.b16 %v217
    %v617 = vunpack.c.l.b16 %v218
    %v618 = vunpack.c.h.b16 %v218
    %v619 = vunpack.c.l.b16 %v219
    %v620 = vunpack.c.h.b16 %v219
    %v621 = vunpack.c.l.b16 %v220
    %v622 = vunpack.c.h.b16 %v220
    %v623 = vunpack.c.l.b16 %v221
    %v624 = vunpack.c.h.b16 %v221
    %v625 = vunpack.c.l.b16 %v222
    %v626 = vunpack.c.h.b16 %v222
    %v627 = vunpack.c.l.b16 %v223
    %v628 = vunpack.c.h.b16 %v223
    %v629 = vunpack.c.l.b16 %v224
    %v630 = vunpack.c.h.b16 %v224
    %v631 = vunpack.c.l.b16 %v225
    %v632 = vunpack.c.h.b16 %v225
    %v633 = vunpack.c.l.b16 %v226
    %v634 = vunpack.c.h.b16 %v226
    %v635 = vunpack.c.l.b16 %v227
    %v636 = vunpack.c.h.b16 %v227
    %v637 = vunpack.c.l.b16 %v228
    %v638 = vunpack.c.h.b16 %v228
    %v639 = vunpack.c.l.b16 %v229
    %v640 = vunpack.c.h.b16 %v229
    %v641 = vunpack.c.l.b16 %v230
    %v642 = vunpack.c.h.b16 %v230
    %v643 = vunpack.c.l.b16 %v231
    %v644 = vunpack.c.h.b16 %v231
    %v645 = vunpack.c.l.b16 %v232
    %v646 = vunpack.c.h.b16 %v232
    %v647 = vunpack.c.l.b16 %v233
    %v648 = vunpack.c.h.b16 %v233
    %v649 = vunpack.c.l.b16 %v234
    %v650 = vunpack.c.h.b16 %v234
    %v651 = vunpack.c.l.b16 %v235
    %v652 = vunpack.c.h.b16 %v235
    %v653 = vunpack.c.l.b16 %v236
    %v654 = vunpack.c.h.b16 %v236
    %v655 = vunpack.c.l.b16 %v237
    %v656 = vunpack.c.h.b16 %v237
    %v657 = vunpack.c.l.b16 %v238
    %v658 = vunpack.c.h.b16 %v238
    %v659 = vunpack.c.l.b16 %v239
    %v660 = vunpack.c.h.b16 %v239
    %v661 = vunpack.c.l.b16 %v240
    %v662 = vunpack.c.h.b16 %v240
    %v663 = vunpack.c.l.b16 %v241
    %v664 = vunpack.c.h.b16 %v241
    %v665 = vunpack.c.l.b16 %v242
    %v666 = vunpack.c.h.b16 %v242
    %v667 = vpack.c.b16 %v413, %v411
    %v668 = vpack.c.b16 %v414, %v412
    %v669 = vpack.c.b16 %v417, %v415
    %v670 = vpack.c.b16 %v418, %v416
    %v671 = vpack.c.b16 %v421, %v419
    %v672 = vpack.c.b16 %v422, %v420
    %v673 = vpack.c.b16 %v425, %v423
    %v674 = vpack.c.b16 %v426, %v424
    %v675 = vpack.c.b16 %v429, %v427
    %v676 = vpack.c.b16 %v430, %v428
    %v677 = vpack.c.b16 %v433, %v431
    %v678 = vpack.c.b16 %v434, %v432
    %v679 = vpack.c.b16 %v437, %v435
    %v680 = vpack.c.b16 %v438, %v436
    %v681 = vpack.c.b16 %v441, %v439
    %v682 = vpack.c.b16 %v442, %v440
    %v683 = vpack.c.b16 %v445, %v443
    %v684 = vpack.c.b16 %v446, %v444
    %v685 = vpack.c.b16 %v449, %v447
    %v686 = vpack.c.b16 %v450, %v448
    %v687 = vpack.c.b16 %v453, %v451
    %v688 = vpack.c.b16 %v454, %v452
    %v689 = vpack.c.b16 %v457, %v455
    %v690 = vpack.c.b16 %v458, %v456
    %v691 = vpack.c.b16 %v461, %v459
    %v692 = vpack.c.b16 %v462, %v460
    %v693 = vpack.c.b16 %v465, %v463
    %v694 = vpack.c.b16 %v466, %v464
    %v695 = vpack.c.b16 %v469, %v467
    %v696 = vpack.c.b16 %v470, %v468
    %v697 = vpack.c.b16 %v473, %v471
    %v698 = vpack.c.b16 %v474, %v472
    %v699 = vpack.c.b16 %v477, %v475
    %v700 = vpack.c.b16 %v478, %v476
    %v701 = vpack.c.b16 %v481, %v479
    %v702 = vpack.c.b16 %v482, %v480
    %v703 = vpack.c.b16 %v485, %v483
    %v704 = vpack.c.b16 %v486, %v484
    %v705 = vpack.c.b16 %v489, %v487
    %v706 = vpack.c.b16 %v490, %v488
    %v707 = vpack.c.b16 %v493, %v491
    %v708 = vpack.c.b16 %v494, %v492
    %v709 = vpack.c.b16 %v497, %v495
    %v710 = vpack.c.b16 %v498, %v496
    %v711 = vpack.c.b16 %v501, %v499
    %v712 = vpack.c.b16 %v502, %v500
    %v713 = vpack.c.b16 %v505, %v503
    %v714 = vpack.c.b16 %v506, %v504
    %v715 = vpack.c.b16 %v509, %v507
    %v716 = vpack.c.b16 %v510, %v508
    %v717 = vpack.c.b16 %v513, %v511
    %v718 = vpack.c.b16 %v514, %v512
    %v719 = vpack.c.b16 %v517, %v515
    %v720 = vpack.c.b16 %v518, %v516
    %v721 = vpack.c.b16 %v521, %v519
    %v722 = vpack.c.b16 %v522, %v520
    %v723 = vpack.c.b16 %v525, %v523
    %v724 = vpack.c.b16 %v526, %v524
    %v725 = vpack.c.b16 %v529, %v527
    %v726 = vpack.c.b16 %v530, %v528
    %v727 = vpack.c.b16 %v533, %v531
    %v728 = vpack.c.b16 %v534, %v532
    %v729 = vpack.c.b16 %v537, %v535
    %v730 = vpack.c.b16 %v538, %v536
    %v731 = vpack.c.b16 %v541, %v539
    %v732 = vpack.c.b16 %v542, %v540
    %v733 = vpack.c.b16 %v545, %v543
    %v734 = vpack.c.b16 %v546, %v544
    %v735 = vpack.c.b16 %v549, %v547
    %v736 = vpack.c.b16 %v550, %v548
    %v737 = vpack.c.b16 %v553, %v551
    %v738 = vpack.c.b16 %v554, %v552
    %v739 = vpack.c.b16 %v557, %v555
    %v740 = vpack.c.b16 %v558, %v556
    %v741 = vpack.c.b16 %v561, %v559
    %v742 = vpack.c.b16 %v562, %v560
    %v743 = vpack.c.b16 %v565, %v563
    %v744 = vpack.c.b16 %v566, %v564
    %v745 = vpack.c.b16 %v569, %v567
    %v746 = vpack.c.b16 %v570, %v568
    %v747 = vpack.c.b16 %v573, %v571
    %v748 = vpack.c.b16 %v574, %v572
    %v749 = vpack.c.b16 %v577, %v575
    %v750 = vpack.c.b16 %v578, %v576
    %v751 = vpack.c.b16 %v581, %v579
    %v752 = vpack.c.b16 %v582, %v580
    %v753 = vpack.c.b16 %v585, %v583
    %v754 = vpack.c.b16 %v586, %v584
    %v755 = vpack.c.b16 %v589, %v587
    %v756 = vpack.c.b16 %v590, %v588
    %v757 = vpack.c.b16 %v593, %v591
    %v758 = vpack.c.b16 %v594, %v592
    %v759 = vpack.c.b16 %v597, %v595
    %v760 = vpack.c.b16 %v598, %v596
    %v761 = vpack.c.b16 %v601, %v599
    %v762 = vpack.c.b16 %v602, %v600
    %v763 = vpack.c.b16 %v605, %v603
    %v764 = vpack.c.b16 %v606, %v604
    %v765 = vpack.c.b16 %v609, %v607
    %v766 = vpack.c.b16 %v610, %v608
    %v767 = vpack.c.b16 %v613, %v611
    %v768 = vpack.c.b16 %v614, %v612
    %v769 = vpack.c.b16 %v617, %v615
    %v770 = vpack.c.b16 %v618, %v616
    %v771 = vpack.c.b16 %v621, %v619
    %v772 = vpack.c.b16 %v622, %v620
    %v773 = vpack.c.b16 %v625, %v623
    %v774 = vpack.c.b16 %v626, %v624
    %v775 = vpack.c.b16 %v629, %v627
    %v776 = vpack.c.b16 %v630, %v628
    %v777 = vpack.c.b16 %v633, %v631
    %v778 = vpack.c.b16 %v634, %v632
    %v779 = vpack.c.b16 %v637, %v635
    %v780 = vpack.c.b16 %v638, %v636
    %v781 = vpack.c.b16 %v641, %v639
    %v782 = vpack.c.b16 %v642, %v640
    %v783 = vpack.c.b16 %v645, %v643
    %v784 = vpack.c.b16 %v646, %v644
    %v785 = vpack.c.b16 %v649, %v647
    %v786 = vpack.c.b16 %v650, %v648
    %v787 = vpack.c.b16 %v653, %v651
    %v788 = vpack.c.b16 %v654, %v652
    %v789 = vpack.c.b16 %v657, %v655
    %v790 = vpack.c.b16 %v658, %v656
    %v791 = vpack.c.b16 %v661, %v659
    %v792 = vpack.c.b16 %v662, %v660
    %v793 = vpack.c.b16 %v665, %v663
    %v794 = vpack.c.b16 %v666, %v664
    %923 = vmatpush.bf16.msra.mxu0 %v681
    %924 = vmatpush.bf16.msra.mxu0 %v679
    %925 = vmatpush.bf16.msra.mxu0 %v677
    %926 = vmatpush.bf16.msra.mxu0 %v675
    %927 = vmatpush.bf16.msra.mxu0 %v673
    %928 = vmatpush.bf16.msra.mxu0 %v671
    %929 = vmatpush.bf16.msra.mxu0 %v669
    %930 = vmatpush.bf16.msra.mxu0 %v667
    %931 = vmatmul.bf16.gmra.mxu0 %v267
    %v932 = vpop.f32.mrf.mxu0
    %v933 = vadd.f32 0.0, %v932
    %v934 = vpop.f32.mrf.mxu0
    %v935 = vadd.f32 0.0, %v934
    %936 = vdwg.mxu0
    %937 = vmatpush.bf16.msra.mxu0 %v697
    %938 = vmatpush.bf16.msra.mxu0 %v695
    %939 = vmatpush.bf16.msra.mxu0 %v693
    %940 = vmatpush.bf16.msra.mxu0 %v691
    %941 = vmatpush.bf16.msra.mxu0 %v689
    %942 = vmatpush.bf16.msra.mxu0 %v687
    %943 = vmatpush.bf16.msra.mxu0 %v685
    %944 = vmatpush.bf16.msra.mxu0 %v683
    %945 = vmatmul.bf16.gmra.mxu0 %v268
    %v946 = vpop.f32.mrf.mxu0
    %v947 = vadd.f32 %v933, %v946
    %v948 = vpop.f32.mrf.mxu0
    %v949 = vadd.f32 %v935, %v948
    %950 = vdwg.mxu0
    %951 = vmatpush.bf16.msra.mxu0 %v713
    %952 = vmatpush.bf16.msra.mxu0 %v711
    %953 = vmatpush.bf16.msra.mxu0 %v709
    %954 = vmatpush.bf16.msra.mxu0 %v707
    %955 = vmatpush.bf16.msra.mxu0 %v705
    %956 = vmatpush.bf16.msra.mxu0 %v703
    %957 = vmatpush.bf16.msra.mxu0 %v701
    %958 = vmatpush.bf16.msra.mxu0 %v699
    %959 = vmatmul.bf16.gmra.mxu0 %v269
    %v960 = vpop.f32.mrf.mxu0
    %v961 = vadd.f32 %v947, %v960
    %v962 = vpop.f32.mrf.mxu0
    %v963 = vadd.f32 %v949, %v962
    %964 = vdwg.mxu0
    %965 = vmatpush.bf16.msra.mxu0 %v729
    %966 = vmatpush.bf16.msra.mxu0 %v727
    %967 = vmatpush.bf16.msra.mxu0 %v725
    %968 = vmatpush.bf16.msra.mxu0 %v723
    %969 = vmatpush.bf16.msra.mxu0 %v721
    %970 = vmatpush.bf16.msra.mxu0 %v719
    %971 = vmatpush.bf16.msra.mxu0 %v717
    %972 = vmatpush.bf16.msra.mxu0 %v715
    %973 = vmatmul.bf16.gmra.mxu0 %v270
    %v974 = vpop.f32.mrf.mxu0
    %v975 = vadd.f32 %v961, %v974
    %v976 = vpop.f32.mrf.mxu0
    %v977 = vadd.f32 %v963, %v976
    %978 = vdwg.mxu0
    %979 = vmatpush.bf16.msra.mxu0 %v745
    %980 = vmatpush.bf16.msra.mxu0 %v743
    %981 = vmatpush.bf16.msra.mxu0 %v741
    %982 = vmatpush.bf16.msra.mxu0 %v739
    %983 = vmatpush.bf16.msra.mxu0 %v737
    %984 = vmatpush.bf16.msra.mxu0 %v735
    %985 = vmatpush.bf16.msra.mxu0 %v733
    %986 = vmatpush.bf16.msra.mxu0 %v731
    %987 = vmatmul.bf16.gmra.mxu0 %v271
    %v988 = vpop.f32.mrf.mxu0
    %v989 = vadd.f32 %v975, %v988
    %v990 = vpop.f32.mrf.mxu0
    %v991 = vadd.f32 %v977, %v990
    %992 = vdwg.mxu0
    %993 = vmatpush.bf16.msra.mxu0 %v761
    %994 = vmatpush.bf16.msra.mxu0 %v759
    %995 = vmatpush.bf16.msra.mxu0 %v757
    %996 = vmatpush.bf16.msra.mxu0 %v755
    %997 = vmatpush.bf16.msra.mxu0 %v753
    %998 = vmatpush.bf16.msra.mxu0 %v751
    %999 = vmatpush.bf16.msra.mxu0 %v749
    %1000 = vmatpush.bf16.msra.mxu0 %v747
    %1001 = vmatmul.bf16.gmra.mxu0 %v272
    %v1002 = vpop.f32.mrf.mxu0
    %v1003 = vadd.f32 %v989, %v1002
    %v1004 = vpop.f32.mrf.mxu0
    %v1005 = vadd.f32 %v991, %v1004
    %1006 = vdwg.mxu0
    %1007 = vmatpush.bf16.msra.mxu0 %v777
    %1008 = vmatpush.bf16.msra.mxu0 %v775
    %1009 = vmatpush.bf16.msra.mxu0 %v773
    %1010 = vmatpush.bf16.msra.mxu0 %v771
    %1011 = vmatpush.bf16.msra.mxu0 %v769
    %1012 = vmatpush.bf16.msra.mxu0 %v767
    %1013 = vmatpush.bf16.msra.mxu0 %v765
    %1014 = vmatpush.bf16.msra.mxu0 %v763
    %1015 = vmatmul.bf16.gmra.mxu0 %v273
    %v1016 = vpop.f32.mrf.mxu0
    %v1017 = vadd.f32 %v1003, %v1016
    %v1018 = vpop.f32.mrf.mxu0
    %v1019 = vadd.f32 %v1005, %v1018
    %1020 = vdwg.mxu0
    %1021 = vmatpush.bf16.msra.mxu0 %v793
    %1022 = vmatpush.bf16.msra.mxu0 %v791
    %1023 = vmatpush.bf16.msra.mxu0 %v789
    %1024 = vmatpush.bf16.msra.mxu0 %v787
    %1025 = vmatpush.bf16.msra.mxu0 %v785
    %1026 = vmatpush.bf16.msra.mxu0 %v783
    %1027 = vmatpush.bf16.msra.mxu0 %v781
    %1028 = vmatpush.bf16.msra.mxu0 %v779
    %1029 = vmatmul.bf16.gmra.mxu0 %v274
    %v1030 = vpop.f32.mrf.mxu0
    %v1031 = vadd.f32 %v1017, %v1030
    %v1032 = vpop.f32.mrf.mxu0
    %v1033 = vadd.f32 %v1019, %v1032
    %1034 = vdwg.mxu0
    %1035 = vmatpush.bf16.msra.mxu0 %v682
    %1036 = vmatpush.bf16.msra.mxu0 %v680
    %1037 = vmatpush.bf16.msra.mxu0 %v678
    %1038 = vmatpush.bf16.msra.mxu0 %v676
    %1039 = vmatpush.bf16.msra.mxu0 %v674
    %1040 = vmatpush.bf16.msra.mxu0 %v672
    %1041 = vmatpush.bf16.msra.mxu0 %v670
    %1042 = vmatpush.bf16.msra.mxu0 %v668
    %1043 = vmatmul.bf16.gmra.mxu0 %v267
    %v1044 = vpop.f32.mrf.mxu0
    %v1045 = vadd.f32 0.0, %v1044
    %v1046 = vpop.f32.mrf.mxu0
    %v1047 = vadd.f32 0.0, %v1046
    %1048 = vdwg.mxu0
    %1049 = vmatpush.bf16.msra.mxu0 %v698
    %1050 = vmatpush.bf16.msra.mxu0 %v696
    %1051 = vmatpush.bf16.msra.mxu0 %v694
    %1052 = vmatpush.bf16.msra.mxu0 %v692
    %1053 = vmatpush.bf16.msra.mxu0 %v690
    %1054 = vmatpush.bf16.msra.mxu0 %v688
    %1055 = vmatpush.bf16.msra.mxu0 %v686
    %1056 = vmatpush.bf16.msra.mxu0 %v684
    %1057 = vmatmul.bf16.gmra.mxu0 %v268
    %v1058 = vpop.f32.mrf.mxu0
    %v1059 = vadd.f32 %v1045, %v1058
    %v1060 = vpop.f32.mrf.mxu0
    %v1061 = vadd.f32 %v1047, %v1060
    %1062 = vdwg.mxu0
    %1063 = vmatpush.bf16.msra.mxu0 %v714
    %1064 = vmatpush.bf16.msra.mxu0 %v712
    %1065 = vmatpush.bf16.msra.mxu0 %v710
    %1066 = vmatpush.bf16.msra.mxu0 %v708
    %1067 = vmatpush.bf16.msra.mxu0 %v706
    %1068 = vmatpush.bf16.msra.mxu0 %v704
    %1069 = vmatpush.bf16.msra.mxu0 %v702
    %1070 = vmatpush.bf16.msra.mxu0 %v700
    %1071 = vmatmul.bf16.gmra.mxu0 %v269
    %v1072 = vpop.f32.mrf.mxu0
    %v1073 = vadd.f32 %v1059, %v1072
    %v1074 = vpop.f32.mrf.mxu0
    %v1075 = vadd.f32 %v1061, %v1074
    %1076 = vdwg.mxu0
    %1077 = vmatpush.bf16.msra.mxu0 %v730
    %1078 = vmatpush.bf16.msra.mxu0 %v728
    %1079 = vmatpush.bf16.msra.mxu0 %v726
    %1080 = vmatpush.bf16.msra.mxu0 %v724
    %1081 = vmatpush.bf16.msra.mxu0 %v722
    %1082 = vmatpush.bf16.msra.mxu0 %v720
    %1083 = vmatpush.bf16.msra.mxu0 %v718
    %1084 = vmatpush.bf16.msra.mxu0 %v716
    %1085 = vmatmul.bf16.gmra.mxu0 %v270
    %v1086 = vpop.f32.mrf.mxu0
    %v1087 = vadd.f32 %v1073, %v1086
    %v1088 = vpop.f32.mrf.mxu0
    %v1089 = vadd.f32 %v1075, %v1088
    %1090 = vdwg.mxu0
    %1091 = vmatpush.bf16.msra.mxu0 %v746
    %1092 = vmatpush.bf16.msra.mxu0 %v744
    %1093 = vmatpush.bf16.msra.mxu0 %v742
    %1094 = vmatpush.bf16.msra.mxu0 %v740
    %1095 = vmatpush.bf16.msra.mxu0 %v738
    %1096 = vmatpush.bf16.msra.mxu0 %v736
    %1097 = vmatpush.bf16.msra.mxu0 %v734
    %1098 = vmatpush.bf16.msra.mxu0 %v732
    %1099 = vmatmul.bf16.gmra.mxu0 %v271
    %v1100 = vpop.f32.mrf.mxu0
    %v1101 = vadd.f32 %v1087, %v1100
    %v1102 = vpop.f32.mrf.mxu0
    %v1103 = vadd.f32 %v1089, %v1102
    %1104 = vdwg.mxu0
    %1105 = vmatpush.bf16.msra.mxu0 %v762
    %1106 = vmatpush.bf16.msra.mxu0 %v760
    %1107 = vmatpush.bf16.msra.mxu0 %v758
    %1108 = vmatpush.bf16.msra.mxu0 %v756
    %1109 = vmatpush.bf16.msra.mxu0 %v754
    %1110 = vmatpush.bf16.msra.mxu0 %v752
    %1111 = vmatpush.bf16.msra.mxu0 %v750
    %1112 = vmatpush.bf16.msra.mxu0 %v748
    %1113 = vmatmul.bf16.gmra.mxu0 %v272
    %v1114 = vpop.f32.mrf.mxu0
    %v1115 = vadd.f32 %v1101, %v1114
    %v1116 = vpop.f32.mrf.mxu0
    %v1117 = vadd.f32 %v1103, %v1116
    %1118 = vdwg.mxu0
    %1119 = vmatpush.bf16.msra.mxu0 %v778
    %1120 = vmatpush.bf16.msra.mxu0 %v776
    %1121 = vmatpush.bf16.msra.mxu0 %v774
    %1122 = vmatpush.bf16.msra.mxu0 %v772
    %1123 = vmatpush.bf16.msra.mxu0 %v770
    %1124 = vmatpush.bf16.msra.mxu0 %v768
    %1125 = vmatpush.bf16.msra.mxu0 %v766
    %1126 = vmatpush.bf16.msra.mxu0 %v764
    %1127 = vmatmul.bf16.gmra.mxu0 %v273
    %v1128 = vpop.f32.mrf.mxu0
    %v1129 = vadd.f32 %v1115, %v1128
    %v1130 = vpop.f32.mrf.mxu0
    %v1131 = vadd.f32 %v1117, %v1130
    %1132 = vdwg.mxu0
    %1133 = vmatpush.bf16.msra.mxu0 %v794
    %1134 = vmatpush.bf16.msra.mxu0 %v792
    %1135 = vmatpush.bf16.msra.mxu0 %v790
    %1136 = vmatpush.bf16.msra.mxu0 %v788
    %1137 = vmatpush.bf16.msra.mxu0 %v786
    %1138 = vmatpush.bf16.msra.mxu0 %v784
    %1139 = vmatpush.bf16.msra.mxu0 %v782
    %1140 = vmatpush.bf16.msra.mxu0 %v780
    %1141 = vmatmul.bf16.gmra.mxu0 %v274
    %v1142 = vpop.f32.mrf.mxu0
    %v1143 = vadd.f32 %v1129, %v1142
    %v1144 = vpop.f32.mrf.mxu0
    %v1145 = vadd.f32 %v1131, %v1144
    %1146 = vdwg.mxu0
    %v1147 = vadd.f32 %v103, %v1031
    %v1148 = vadd.f32 %v104, %v1143
    %v1149 = vadd.f32 %v105, %v1033
    %v1150 = vadd.f32 %v106, %v1145
    %1151 = vst [vmem:[#allocation2] sm:$0xff] %v1147
    %1152 = vst [vmem:[#allocation2 + $0x8] sm:$0xff] %v1148
    %1153 = vst [vmem:[#allocation2 + $0x10] sm:$0xff] %v1149
    %1154 = vst [vmem:[#allocation2 + $0x18] sm:$0xff] %v1150
    // Predicated region
    $region46: #{tpu_custom_call.1} parent=1 // pred_check
      %p1155 = pneg %p85
    $region47: #{tpu_custom_call.1} parent=1 // pred_check_branch
      %1157 = sbr.rel (%p1155) target = $region49
    $region48: #{tpu_custom_call.1} parent=1 // pred_region
      %v1158 = vld [vmem:[#allocation2] sm:$0xff]
      %v1159 = vld [vmem:[#allocation2 + $0x8] sm:$0xff]
      %v1160 = vld [vmem:[#allocation2 + $0x10] sm:$0xff]
      %v1161 = vld [vmem:[#allocation2 + $0x18] sm:$0xff]
      %v1162 = vld [vmem:[#allocation10] sm:$0x3]
      %v1164 = vperm.slane %v1162, 0
      %v1165 = vperm.slane %v1162, 1
      %v1168 = vadd.f32 %v1158, %v1164
      %v1169 = vadd.f32 %v1159, %v1165
      %v1170 = vadd.f32 %v1160, %v1164
      %v1171 = vadd.f32 %v1161, %v1165
      %v1172 = vld [vmem:[#allocation3] sm:$0xff]
      %v1173 = vld [vmem:[#allocation3 + $0x8] sm:$0xff]
      %v1174 = vpack.c.bf16 %v1170, %v1168
      %v1175 = vpack.c.bf16 %v1171, %v1169
      %v1176 = vld [vmem:[#allocation11] sm:$0xf]
      %v1177 = vld [vmem:[#allocation11 + $0x4] sm:$0xf]
      %v1178 = vld [vmem:[#allocation11 + $0x8] sm:$0xf]
      %v1179 = vld [vmem:[#allocation11 + $0xc] sm:$0xf]
      %v1180 = vld [vmem:[#allocation11 + $0x10] sm:$0xf]
      %v1181 = vld [vmem:[#allocation11 + $0x14] sm:$0xf]
      %v1182 = vld [vmem:[#allocation11 + $0x18] sm:$0xf]
      %v1183 = vld [vmem:[#allocation11 + $0x1c] sm:$0xf]
      %v1184 = vld [vmem:[#allocation11 + $0x20] sm:$0xf]
      %v1185 = vld [vmem:[#allocation11 + $0x24] sm:$0xf]
      %v1186 = vld [vmem:[#allocation11 + $0x28] sm:$0xf]
      %v1187 = vld [vmem:[#allocation11 + $0x2c] sm:$0xf]
      %v1188 = vld [vmem:[#allocation11 + $0x30] sm:$0xf]
      %v1189 = vld [vmem:[#allocation11 + $0x34] sm:$0xf]
      %v1190 = vld [vmem:[#allocation11 + $0x38] sm:$0xf]
      %v1191 = vld [vmem:[#allocation11 + $0x3c] sm:$0xf]
      %v1192 = vld [vmem:[#allocation11 + $0x40] sm:$0xf]
      %v1193 = vld [vmem:[#allocation11 + $0x44] sm:$0xf]
      %v1194 = vld [vmem:[#allocation11 + $0x48] sm:$0xf]
      %v1195 = vld [vmem:[#allocation11 + $0x4c] sm:$0xf]
      %v1196 = vld [vmem:[#allocation11 + $0x50] sm:$0xf]
      %v1197 = vld [vmem:[#allocation11 + $0x54] sm:$0xf]
      %v1198 = vld [vmem:[#allocation11 + $0x58] sm:$0xf]
      %v1199 = vld [vmem:[#allocation11 + $0x5c] sm:$0xf]
      %v1200 = vld [vmem:[#allocation11 + $0x60] sm:$0xf]
      %v1201 = vld [vmem:[#allocation11 + $0x64] sm:$0xf]
      %v1202 = vld [vmem:[#allocation11 + $0x68] sm:$0xf]
      %v1203 = vld [vmem:[#allocation11 + $0x6c] sm:$0xf]
      %v1204 = vld [vmem:[#allocation11 + $0x70] sm:$0xf]
      %v1205 = vld [vmem:[#allocation11 + $0x74] sm:$0xf]
      %v1206 = vld [vmem:[#allocation11 + $0x78] sm:$0xf]
      %v1207 = vld [vmem:[#allocation11 + $0x7c] sm:$0xf]
      %v1240 = vunpack.c.l.b16 %v1176
      %v1241 = vunpack.c.l.b16 %v1177
      %v1242 = vunpack.c.l.b16 %v1178
      %v1243 = vunpack.c.l.b16 %v1179
      %v1244 = vunpack.c.l.b16 %v1180
      %v1245 = vunpack.c.l.b16 %v1181
      %v1246 = vunpack.c.l.b16 %v1182
      %v1247 = vunpack.c.l.b16 %v1183
      %v1248 = vunpack.c.l.b16 %v1184
      %v1249 = vunpack.c.l.b16 %v1185
      %v1250 = vunpack.c.l.b16 %v1186
      %v1251 = vunpack.c.l.b16 %v1187
      %v1252 = vunpack.c.l.b16 %v1188
      %v1253 = vunpack.c.l.b16 %v1189
      %v1254 = vunpack.c.l.b16 %v1190
      %v1255 = vunpack.c.l.b16 %v1191
      %v1256 = vunpack.c.l.b16 %v1192
      %v1257 = vunpack.c.l.b16 %v1193
      %v1258 = vunpack.c.l.b16 %v1194
      %v1259 = vunpack.c.l.b16 %v1195
      %v1260 = vunpack.c.l.b16 %v1196
      %v1261 = vunpack.c.l.b16 %v1197
      %v1262 = vunpack.c.l.b16 %v1198
      %v1263 = vunpack.c.l.b16 %v1199
      %v1264 = vunpack.c.l.b16 %v1200
      %v1265 = vunpack.c.l.b16 %v1201
      %v1266 = vunpack.c.l.b16 %v1202
      %v1267 = vunpack.c.l.b16 %v1203
      %v1268 = vunpack.c.l.b16 %v1204
      %v1269 = vunpack.c.l.b16 %v1205
      %v1270 = vunpack.c.l.b16 %v1206
      %v1271 = vunpack.c.l.b16 %v1207
      %v1272 = vpack.c.b16 %v1241, %v1240
      %v1273 = vpack.c.b16 %v1243, %v1242
      %v1274 = vpack.c.b16 %v1245, %v1244
      %v1275 = vpack.c.b16 %v1247, %v1246
      %v1276 = vpack.c.b16 %v1249, %v1248
      %v1277 = vpack.c.b16 %v1251, %v1250
      %v1278 = vpack.c.b16 %v1253, %v1252
      %v1279 = vpack.c.b16 %v1255, %v1254
      %v1280 = vpack.c.b16 %v1257, %v1256
      %v1281 = vpack.c.b16 %v1259, %v1258
      %v1282 = vpack.c.b16 %v1261, %v1260
      %v1283 = vpack.c.b16 %v1263, %v1262
      %v1284 = vpack.c.b16 %v1265, %v1264
      %v1285 = vpack.c.b16 %v1267, %v1266
      %v1286 = vpack.c.b16 %v1269, %v1268
      %v1287 = vpack.c.b16 %v1271, %v1270
      %1304 = vmatpush.bf16.msra.mxu0 %v1279
      %1305 = vmatpush.bf16.msra.mxu0 %v1278
      %1306 = vmatpush.bf16.msra.mxu0 %v1277
      %1307 = vmatpush.bf16.msra.mxu0 %v1276
      %1308 = vmatpush.bf16.msra.mxu0 %v1275
      %1309 = vmatpush.bf16.msra.mxu0 %v1274
      %1310 = vmatpush.bf16.msra.mxu0 %v1273
      %1311 = vmatpush.bf16.msra.mxu0 %v1272
      %1312 = vmatmul.bf16.gmra.mxu0 %v1174
      %v1313 = vpop.f32.mrf.mxu0
      %v1314 = vadd.f32 0.0, %v1313
      %v1315 = vpop.f32.mrf.mxu0
      %v1316 = vadd.f32 0.0, %v1315
      %1317 = vdwg.mxu0
      %1318 = vmatpush.bf16.msra.mxu0 %v1287
      %1319 = vmatpush.bf16.msra.mxu0 %v1286
      %1320 = vmatpush.bf16.msra.mxu0 %v1285
      %1321 = vmatpush.bf16.msra.mxu0 %v1284
      %1322 = vmatpush.bf16.msra.mxu0 %v1283
      %1323 = vmatpush.bf16.msra.mxu0 %v1282
      %1324 = vmatpush.bf16.msra.mxu0 %v1281
      %1325 = vmatpush.bf16.msra.mxu0 %v1280
      %1326 = vmatmul.bf16.gmra.mxu0 %v1175
      %v1327 = vpop.f32.mrf.mxu0
      %v1328 = vadd.f32 %v1314, %v1327
      %v1329 = vpop.f32.mrf.mxu0
      %v1330 = vadd.f32 %v1316, %v1329
      %1331 = vdwg.mxu0
      %v1332 = vadd.f32 %v1172, %v1328
      %v1333 = vadd.f32 %v1173, %v1330
      %1334 = vst [vmem:[#allocation3] sm:$0xff] %v1332
      %1335 = vst [vmem:[#allocation3 + $0x8] sm:$0xff] %v1333
      %v1336 = vld [vmem:[#allocation4] sm:$0xff]
      %v1337 = vld [vmem:[#allocation4 + $0x8] sm:$0xff]
      %v1338 = vmul.f32 %v1168, %v1168
      %v1339 = vmul.f32 %v1169, %v1169
      %v1340 = vmul.f32 %v1170, %v1170
      %v1341 = vmul.f32 %v1171, %v1171
      %v1342 = vadd.f32 %v1338, %v1339
      %1343 = vadd.xlane.f32.xlu0 %v1342
      %v1344 = vpop.xlane.xlu0 %1343
      %v1345 = vadd.f32 %v1340, %v1341
      %1346 = vadd.xlane.f32.xlu0 %v1345
      %v1347 = vpop.xlane.xlu0 %1346
      %v1348 = vadd.f32 %v1336, %v1344
      %v1349 = vadd.f32 %v1337, %v1347
      %vm1350 = vcmask 7168
      %1351 = vst.msk [vmem:[#allocation4] sm:$0xff] %vm1350, %v1348
      %1352 = vst.msk [vmem:[#allocation4 + $0x8] sm:$0xff] %vm1350, %v1349
    $region49: #{tpu_custom_call.1} parent=1 // pred_fallthru
      _
    // Predicated region
    $region50: #{tpu_custom_call.1} parent=1 // pred_check
      _
    $region51: #{tpu_custom_call.1} parent=1 // pred_check_branch
      %1354 = sbr.rel (%p94) target = $region53
    $region52: #{tpu_custom_call.1} parent=1 // pred_region
      %v1355 = vld [vmem:[#allocation3] sm:$0xff]
      %v1356 = vld [vmem:[#allocation3 + $0x8] sm:$0xff]
      %v1357 = vld [vmem:[%s4] sm:$0x1]
      %v1359 = vperm.slane %v1357, 0
      %v1361 = vadd.f32 %v1355, %v1359
      %v1362 = vadd.f32 %v1356, %v1359
      %1363 = vst [vmem:[#allocation13] sm:$0xff] %v1361
      %1364 = vst [vmem:[#allocation13 + $0x8] sm:$0xff] %v1362
      %v1365 = vld [vmem:[#allocation4] sm:$0xff]
      %v1366 = vld [vmem:[#allocation4 + $0x8] sm:$0xff]
      %s1367 = smul.u32 0, 16
      %v1368 = vlaneseq
      %v1369 = vshrl.u32 %v1368, 7
      %v1370 = vadd.s32 %v1369, 8
      %v1371 = vstv %s1367
      %v1372 = vadd.s32 %v1371, %v1369
      %v1373 = vadd.s32 %v1371, %v1370
      %vm1374 = vcmp.lt.s32.totalorder %v1372, 2
      %vm1375 = vcmp.lt.s32.totalorder %v1373, 2
      %v1376 = vsel %vm1374, %v1365, 0.0
      %v1377 = vsel %vm1375, %v1366, 0.0
      %vm1378 = vcmask 7168
      %v1379 = vsel %vm1378, %v1376, 0.0
      %v1380 = vsel %vm1378, %v1377, 0.0
      %v1381 = vadd.f32 %v1379, %v1380
      %v1382 = vrot.slane %v1381, 4
      %v1383 = vadd.f32 %v1381, %v1382
      %v1384 = vrot.slane %v1383, 2
      %v1385 = vadd.f32 %v1383, %v1384
      %v1386 = vrot.slane %v1385, 1
      %v1387 = vadd.f32 %v1385, %v1386
      %1389 = vset.pattern.permute.xlu0 0
      %1390 = vperm.xlu0 %1389, %v1387
      %v1391 = vpop.permute.xlu0 %1390
      %v1393 = vadd.f32 %v1391, 0.0
      %1394 = vst [vmem:[#allocation14] sm:$0xff] %v1393
    $region53: #{tpu_custom_call.1} parent=1 // pred_fallthru
      _
    // Predicated region
    $region54: #{tpu_custom_call.1} parent=1 // pred_check
      _
    $region55: #{tpu_custom_call.1} parent=1 // pred_check_branch
      %1396 = sbr.rel (0) target = $region57
    $region56: #{tpu_custom_call.1} parent=1 // pred_region
      %1398 = vsyncadd [#allocation7], 0
      %s1399 = sshll.u32 [#allocation13], 4
      %s1400 = int_to_ptr.vmem [resolvable:$true] %s1399
      %s1401 = sshll.u32 %s5, 4
      %s1402 = int_to_ptr.hbm [resolvable:$true] %s1401
      %1407 = dma.vmem_to_hbm [thread:$0]  %s1400, 256, %s1402, [#allocation7], 128, 128, 8
    $region57: #{tpu_custom_call.1} parent=1 // pred_fallthru
      _
    // Predicated region
    $region58: #{tpu_custom_call.1} parent=1 // pred_check
      _
    $region59: #{tpu_custom_call.1} parent=1 // pred_check_branch
      %1409 = sbr.rel (0) target = $region61
    $region60: #{tpu_custom_call.1} parent=1 // pred_region
      %1411 = vsyncadd [#allocation15], 0
      %s1413 = sshll.u32 [#allocation14], 4
      %s1414 = int_to_ptr.vmem [resolvable:$true] %s1413
      %s1415 = sshll.u32 %s6, 4
      %s1416 = int_to_ptr.hbm [resolvable:$true] %s1415
      %1418 = dma.vmem_to_hbm [thread:$0]  %s1414, 128, %s1416, [#allocation15]
    $region61: #{tpu_custom_call.1} parent=1 // pred_fallthru
      _
    // Predicated region
    $region62: #{tpu_custom_call.1} parent=1 // pred_check
      _
    $region63: #{tpu_custom_call.1} parent=1 // pred_check_branch
      %1420 = sbr.rel (0) target = $region65
    $region64: #{tpu_custom_call.1} parent=1 // pred_region
      %1422 = dma.done [#allocation7], 256
    $region65: #{tpu_custom_call.1} parent=1 // pred_fallthru
      _
    // Predicated region
    $region66: #{tpu_custom_call.1} parent=1 // pred_check
      _
    $region67: #{tpu_custom_call.1} parent=1 // pred_check_branch
      %1424 = sbr.rel (0) target = $region69
    $region68: #{tpu_custom_call.1} parent=1 // pred_region
      %1426 = dma.done [#allocation15], 128
    $region69: #{tpu_custom_call.1} parent=1 // pred_fallthru
      _
    %1427 = vsyncpa [#allocation6], 1
    %1428 = vsyncpa [#allocation9], 1
    %1429 = vsyncpa [#allocation12], 1
    %1430 = vsyncpa [#allocation7], 1
    %1431 = vsyncpa [#allocation15], 1

</llo_original>
